<compile_context>
chip_gen: v6e
topology: v6e:2x2x1
jax: 0.10.0
libtpu: 0.0.40
codegen_flags: <defaults>
</compile_context>

<pallas_src>
import functools

import jax
import jax.numpy as jnp
from jax.experimental import pallas as pl
from jax.experimental.pallas import tpu as pltpu

LN_EPS = 1e-5
_HIGHEST = jax.lax.Precision.HIGHEST


# ------------------------------ fused RGCN kernel ------------------------------
def rgcn_fused_kernel(h_ref, featwb_ref, adj_ref, w1_ref, gamma_ref, beta_ref,
                      relw_ref, dmw_ref, o_ref, *,
                      num_layers, relation_num, batch_block, n_nodes, mxu_dtype):
    bb, n = batch_block, n_nodes
    hdim = h_ref.shape[-1]

    h = h_ref[...]                                   # [bb*n, H] float32 (flattened batch block)

    def layer_body(l, h):
        w1 = w1_ref[l]                               # [H, H]       (mxu_dtype)
        featwb = featwb_ref[l]                       # [bb*n, H]    (f32, = feature @ W2 + b)
        relw_l = relw_ref[l]                         # [R+1, H, H]  (mxu_dtype)

        # fc: concat([h, feature]) @ W_fc + b  ==  h @ W1 + (feature @ W2 + b)
        z = jnp.dot(h.astype(mxu_dtype), w1,
                    preferred_element_type=jnp.float32) + featwb

        # LayerNorm over the hidden dim (f32 statistics on the VPU, rsqrt on the EUP)
        mu = jnp.mean(z, axis=-1, keepdims=True)
        var = jnp.mean((z - mu) ** 2, axis=-1, keepdims=True)
        z = (z - mu) * jax.lax.rsqrt(var + LN_EPS)
        z = z * gamma_ref[l] + beta_ref[l]

        # TODO(synk): F.dropout (training=True by default in the reference) is stochastic;
        # modelled as identity (inference mode).
        z = jnp.tanh(z)
        zc = z.astype(mxu_dtype)

        # relation 0 is the identity adjacency: its support is z itself.
        acc = jnp.dot(zc, relw_l[0], preferred_element_type=jnp.float32)
        for r in range(relation_num):
            # block-diagonal adjacency covers the whole batch block in one 2-D matmul
            # (K = bb*n, no lane-offset slicing of the hidden activations).
            s = jnp.dot(adj_ref[0, r], zc, preferred_element_type=jnp.float32)
            acc = acc + jnp.dot(s.astype(mxu_dtype), relw_l[r + 1],
                                preferred_element_type=jnp.float32)

        # residual with the post-tanh activations (matches `output + x` in the reference).
        return acc + z

    if num_layers <= 4:
        for l in range(num_layers):                  # static unroll; params stay resident in VMEM
            h = layer_body(l, h)
    else:
        # deeper nets: one compact body, layer index kept in a scalar register
        h = jax.lax.fori_loop(0, num_layers, layer_body, h)

    # DistMult scoring: S[b] = (H[b] * w) @ H[b]^T, contracting the hidden dim directly
    # (no [H, N] transpose materialised).
    # TODO(synk): DistMult class body was not given; diagonal-bilinear score assumed.
    hb = h.reshape(bb, n, hdim)
    hw = (h * dmw_ref[...]).reshape(bb, n, hdim)
    scores = jax.lax.dot_general(hw, hb,
                                 dimension_numbers=(((2,), (2,)), ((0,), (0,))),
                                 preferred_element_type=jnp.float32)    # [bb, n, n]
    # lane-dense output slab: n*n lanes per batch row -> unmasked stores / dense DMA.
    o_ref[...] = scores.reshape(1, bb, n * n)


# ------------------------------ wrapper ------------------------------
def _choose_batch_block(bsz, n, rel, hdim, itemsize, *, budget_bytes=40 << 20, max_m=512):
    """Largest divisor of bsz with M = bb*n <= max_m and double-buffered blocks in budget;
    then prefer >= 2 grid steps (v7x has 2 TensorCores to shard 'parallel' axes over)."""
    best = 1
    for bb in range(1, bsz + 1):
        if bsz % bb:
            continue
        if bb * n > max_m:
            continue
        blk = 2 * (rel * (bb * n) ** 2 * itemsize      # block-diag adjacency (dominant)
                   + bb * n * n * 4                    # output slab
                   + 2 * bb * n * hdim * 4)            # activations / featwb slices
        if blk > budget_bytes:
            continue
        best = bb
    if bsz // best == 1 and bsz > 1:                   # keep >= 2 grid steps when possible
        for bb in range(best - 1, 0, -1):
            if bsz % bb == 0:
                best = bb
                break
    return best


def rgcn_forward_fused(h0, feature, adj, w1, w2, b, gamma, beta, relw, dmw, *,
                       batch_block=None, mxu_dtype=jnp.float32):
    bsz, n, hdim = h0.shape
    num_layers = w1.shape[0]
    rel = adj.shape[1]
    assert n % 8 == 0, "pad the node count to a multiple of 8 (sublane tile) first"
    itemsize = jnp.dtype(mxu_dtype).itemsize

    bb = batch_block if batch_block is not None else _choose_batch_block(
        bsz, n, rel, hdim, itemsize)
    assert bsz % bb == 0, "batch must be divisible by the batch block"
    nb = bsz // bb

    # fc feature part precomputed once: feature @ W2 + bias -> [L, B*N, H]
    featwb = (jnp.einsum("bnf,lfk->lbnk", feature, w2, precision=_HIGHEST)
              + b[:, :, None, :]).reshape(num_layers, bsz * n, hdim)

    # block-diagonal adjacency per batch block: [nb, R, bb*n, bb*n]
    adj_g = jnp.transpose(adj.reshape(nb, bb, rel, n, n), (0, 2, 1, 3, 4))
    eye_bb = jnp.eye(bb, dtype=adj.dtype)
    adj_bd = (adj_g[:, :, :, :, None, :] * eye_bb[None, None, :, None, :, None]
              ).reshape(nb, rel, bb * n, bb * n).astype(mxu_dtype)

    h0f = h0.reshape(bsz * n, hdim)
    w1c = w1.astype(mxu_dtype)
    relwc = relw.astype(mxu_dtype)

    # explicit VMEM budget: double-buffered blocks + resident weights + headroom
    f32b = 4
    block_bytes = (bb * n * hdim * f32b                              # h0 block
                   + num_layers * bb * n * hdim * f32b               # featwb block
                   + rel * (bb * n) ** 2 * itemsize                  # adjacency block
                   + num_layers * hdim * hdim * itemsize             # W1
                   + 2 * num_layers * hdim * f32b                    # gamma / beta
                   + num_layers * (rel + 1) * hdim * hdim * itemsize  # relw
                   + hdim * f32b                                     # DistMult diagonal
                   + bb * n * n * f32b)                              # output slab
    vmem_limit = int(min(max(2 * block_bytes + (8 << 20), 16 << 20), 64 << 20))

    kernel = functools.partial(rgcn_fused_kernel, num_layers=num_layers,
                               relation_num=rel, batch_block=bb, n_nodes=n,
                               mxu_dtype=mxu_dtype)
    out = pl.pallas_call(
        kernel,
        out_shape=jax.ShapeDtypeStruct((nb, bb, n * n), jnp.float32),
        grid=(nb,),
        in_specs=[
            pl.BlockSpec((bb * n, hdim), lambda i: (i, 0)),                        # h0 (flat)
            pl.BlockSpec((num_layers, bb * n, hdim), lambda i: (0, i, 0)),         # feat@W2 + b
            pl.BlockSpec((1, rel, bb * n, bb * n), lambda i: (i, 0, 0, 0)),        # block-diag adj
            pl.BlockSpec((num_layers, hdim, hdim), lambda i: (0, 0, 0)),           # fc W (hidden)
            pl.BlockSpec((num_layers, 1, hdim), lambda i: (0, 0, 0)),              # LN gamma
            pl.BlockSpec((num_layers, 1, hdim), lambda i: (0, 0, 0)),              # LN beta
            pl.BlockSpec((num_layers, rel + 1, hdim, hdim), lambda i: (0, 0, 0, 0)),  # a @ W
            pl.BlockSpec((1, hdim), lambda i: (0, 0)),                             # DistMult diag
        ],
        out_specs=pl.BlockSpec((1, bb, n * n), lambda i: (i, 0, 0)),               # lane-dense
        compiler_params=pltpu.CompilerParams(
            dimension_semantics=("parallel",),
            vmem_limit_bytes=vmem_limit),
    )(h0f, featwb, adj_bd, w1c, gamma, beta, relwc, dmw)
    return out.reshape(bsz, n, n)


# ------------------------------ parameter setup ------------------------------
def init_params(key, max_number, hidden_dim, relation_num, v_num, gcn_layer):
    keys = jax.random.split(key, 2 + gcn_layer)
    params = {}

    # nn.Embedding(max_number, hidden_dim - 2, padding_idx=0)
    emb = jax.random.normal(keys[0], (max_number, hidden_dim - 2), jnp.float32)
    emb = emb.at[0].set(0.0)
    params["embedding"] = emb

    # DistMult diagonal relation vector
    params["distmult_w"] = jax.random.normal(keys[1], (1, hidden_dim), jnp.float32) * 0.1

    w1s, w2s, bs, gs, bts, relws = [], [], [], [], [], []
    for l in range(gcn_layer):
        k_fc, k_b, k_W, k_a = jax.random.split(keys[2 + l], 4)
        fan_in = hidden_dim + 2
        bound = 1.0 / jnp.sqrt(fan_in)
        w_fc = jax.random.uniform(k_fc, (fan_in, hidden_dim), jnp.float32, -bound, bound)
        b_fc = jax.random.uniform(k_b, (1, hidden_dim), jnp.float32, -bound, bound)

        # xavier-normal-style init for W [H, v_num, H] and a [R+1, v_num]
        std_W = jnp.sqrt(2.0 / (v_num * hidden_dim + hidden_dim * hidden_dim))
        W = jax.random.normal(k_W, (hidden_dim, v_num, hidden_dim), jnp.float32) * std_W
        std_a = jnp.sqrt(2.0 / (relation_num + 1 + v_num))
        a = jax.random.normal(k_a, (relation_num + 1, v_num), jnp.float32) * std_a

        # torch.matmul(a, W).permute(1, 0, 2) -> [R+1, H, H]
        relw = jnp.einsum("rv,hvk->rhk", a, W, precision=_HIGHEST)

        w1s.append(w_fc[:hidden_dim, :])
        w2s.append(w_fc[hidden_dim:, :])
        bs.append(b_fc)
        gs.append(jnp.ones((1, hidden_dim), jnp.float32))
        bts.append(jnp.zeros((1, hidden_dim), jnp.float32))
        relws.append(relw)

    params["w1"] = jnp.stack(w1s)          # [L, H, H]
    params["w2"] = jnp.stack(w2s)          # [L, 2, H]
    params["b"] = jnp.stack(bs)            # [L, 1, H]
    params["gamma"] = jnp.stack(gs)        # [L, 1, H]
    params["beta"] = jnp.stack(bts)        # [L, 1, H]
    params["relw"] = jnp.stack(relws)      # [L, R+1, H, H]
    return params


# --------------------------------- full model ---------------------------------
def rgcn_forward(params, x_idx, feature, adj, *, batch_block=None, mxu_dtype=jnp.float32):
    # embedding lookup + concat with features (plain-JAX glue outside the kernel)
    embed = params["embedding"][x_idx]                       # [B, N, H-2]
    h0 = jnp.concatenate([embed, feature], axis=2)           # [B, N, H]
    return rgcn_forward_fused(h0, feature, adj,
                              params["w1"], params["w2"], params["b"],
                              params["gamma"], params["beta"], params["relw"],
                              params["distmult_w"],
                              batch_block=batch_block, mxu_dtype=mxu_dtype)   # [B, N, N]


# --------------------------- pure-JAX reference (check) ---------------------------
def rgcn_reference(params, x_idx, feature, adj):
    embed = params["embedding"][x_idx]
    h = jnp.concatenate([embed, feature], axis=2)
    rel = adj.shape[1]
    for l in range(params["w1"].shape[0]):
        z = (jnp.einsum("bnh,hk->bnk", h, params["w1"][l], precision=_HIGHEST)
             + jnp.einsum("bnf,fk->bnk", feature, params["w2"][l], precision=_HIGHEST)
             + params["b"][l])
        mu = jnp.mean(z, -1, keepdims=True)
        var = jnp.mean((z - mu) ** 2, -1, keepdims=True)
        z = (z - mu) / jnp.sqrt(var + LN_EPS)
        z = z * params["gamma"][l] + params["beta"][l]
        z = jnp.tanh(z)
        relw = params["relw"][l]
        out = jnp.einsum("bnh,hk->bnk", z, relw[0], precision=_HIGHEST)
        for r in range(rel):
            s = jnp.einsum("bnm,bmh->bnh", adj[:, r], z, precision=_HIGHEST)
            out = out + jnp.einsum("bnh,hk->bnk", s, relw[r + 1], precision=_HIGHEST)
        h = out + z
    return jnp.einsum("bnh,bmh->bnm", h * params["distmult_w"], h, precision=_HIGHEST)


if __name__ == "__main__":
    # Small shapes consistent with the module; batch 4 -> default batch block 2 ->
    # two "parallel" grid steps (exercises the pipeline and v7x's 2 TensorCores).
    max_number, hidden_dim, relation_num, v_num, gcn_layer = 50, 32, 3, 8, 2
    bsz, n_nodes = 4, 16

    key = jax.random.PRNGKey(0)
    k_param, k_idx, k_feat, k_adj = jax.random.split(key, 4)

    params = init_params(k_param, max_number, hidden_dim, relation_num, v_num, gcn_layer)

    x_idx = jax.random.randint(k_idx, (bsz, n_nodes), 0, max_number, jnp.int32)
    feature = jax.random.normal(k_feat, (bsz, n_nodes, 2), jnp.float32)
    adj = (jax.random.uniform(k_adj, (bsz, relation_num, n_nodes, n_nodes)) > 0.7
           ).astype(jnp.float32)

    out = jax.jit(rgcn_forward)(params, x_idx, feature, adj)
    out = jax.block_until_ready(out)

    ref = rgcn_reference(params, x_idx, feature, adj)
    assert out.shape == (bsz, n_nodes, n_nodes)
    assert bool(jnp.all(jnp.isfinite(out)))
    max_err = float(jnp.max(jnp.abs(out - ref)))
    # all-f32 kernel path: tight tolerance (only MXU pass decomposition / accumulation-order
    # differences remain).  Use mxu_dtype=jnp.bfloat16 on v6e/v7x for the fast path.
    assert jnp.allclose(out, ref, rtol=1e-4, atol=1e-4), max_err
    print("KERNEL_OK")
</pallas_src>

<mosaic_0001>
module attributes {stable_mosaic.version = 11 : i64} {
  func.func @rgcn_fused_kernel(%arg0: i32, %arg1: memref<32x32xf32, #tpu.memory_space<vmem>>, %arg2: memref<2x32x32xf32, #tpu.memory_space<vmem>>, %arg3: memref<1x3x32x32xf32, #tpu.memory_space<vmem>>, %arg4: memref<2x32x32xf32, #tpu.memory_space<vmem>>, %arg5: memref<2x1x32xf32, #tpu.memory_space<vmem>>, %arg6: memref<2x1x32xf32, #tpu.memory_space<vmem>>, %arg7: memref<2x4x32x32xf32, #tpu.memory_space<vmem>>, %arg8: memref<1x32xf32, #tpu.memory_space<vmem>>, %arg9: memref<1x2x256xf32, #tpu.memory_space<vmem>>) attributes {dimension_semantics = [#tpu.dimension_semantics<parallel>], iteration_bounds = array<i64: 2>, scalar_prefetch = 0 : i64, scratch_operands = 0 : i64, tpu.core_type = #tpu.core_type<tc>, window_params = [{transform_indices = @transform_0, window_bounds = array<i64: 32, 32>}, {transform_indices = @transform_1, window_bounds = array<i64: 2, 32, 32>}, {transform_indices = @transform_2, window_bounds = array<i64: 1, 3, 32, 32>}, {pipeline_mode = #tpu.pipeline_mode<synchronous>, transform_indices = @transform_3, window_bounds = array<i64: 2, 32, 32>}, {pipeline_mode = #tpu.pipeline_mode<synchronous>, transform_indices = @transform_4, window_bounds = array<i64: 2, 1, 32>}, {pipeline_mode = #tpu.pipeline_mode<synchronous>, transform_indices = @transform_5, window_bounds = array<i64: 2, 1, 32>}, {pipeline_mode = #tpu.pipeline_mode<synchronous>, transform_indices = @transform_6, window_bounds = array<i64: 2, 4, 32, 32>}, {pipeline_mode = #tpu.pipeline_mode<synchronous>, transform_indices = @transform_7, window_bounds = array<i64: 1, 32>}, {transform_indices = @transform_8, window_bounds = array<i64: 1, 2, 256>}]} {
    %c0 = arith.constant 0 : index
    %c0_0 = arith.constant 0 : index
    %0 = vector.load %arg1[%c0, %c0_0] : memref<32x32xf32, #tpu.memory_space<vmem>>, vector<32x32xf32>
    %c0_1 = arith.constant 0 : index
    %c0_2 = arith.constant 0 : index
    %c0_3 = arith.constant 0 : index
    %1 = vector.load %arg4[%c0_1, %c0_2, %c0_3] : memref<2x32x32xf32, #tpu.memory_space<vmem>>, vector<1x32x32xf32>
    %2 = vector.shape_cast %1 : vector<1x32x32xf32> to vector<32x32xf32>
    %c0_4 = arith.constant 0 : index
    %c0_5 = arith.constant 0 : index
    %c0_6 = arith.constant 0 : index
    %3 = vector.load %arg2[%c0_4, %c0_5, %c0_6] : memref<2x32x32xf32, #tpu.memory_space<vmem>>, vector<1x32x32xf32>
    %4 = vector.shape_cast %3 : vector<1x32x32xf32> to vector<32x32xf32>
    %c0_7 = arith.constant 0 : index
    %c0_8 = arith.constant 0 : index
    %c0_9 = arith.constant 0 : index
    %c0_10 = arith.constant 0 : index
    %5 = vector.load %arg7[%c0_7, %c0_8, %c0_9, %c0_10] : memref<2x4x32x32xf32, #tpu.memory_space<vmem>>, vector<1x4x32x32xf32>
    %6 = vector.shape_cast %5 : vector<1x4x32x32xf32> to vector<4x32x32xf32>
    %cst = arith.constant dense<0.000000e+00> : vector<32x32xf32>
    %7 = tpu.matmul %0, %2, %cst {dimension_numbers = #tpu.dot_dimension_numbers<[1], [0], [0], [1], [0, 0, 1, 1], [], []>} : vector<32x32xf32>, vector<32x32xf32>, vector<32x32xf32> -> vector<32x32xf32>
    %8 = arith.addf %7, %4 : vector<32x32xf32>
    %cst_11 = arith.constant dense<0.000000e+00> : vector<32xf32>
    %9 = vector.multi_reduction <add>, %8, %cst_11 [1] : vector<32x32xf32> to vector<32xf32>
    %10 = vector.shape_cast %9 : vector<32xf32> to vector<32x1xf32>
    %cst_12 = arith.constant 3.200000e+01 : f32
    %11 = vector.broadcast %cst_12 : f32 to vector<32x1xf32>
    %12 = arith.divf %10, %11 : vector<32x1xf32>
    %13 = vector.broadcast %12 : vector<32x1xf32> to vector<32x32xf32>
    %14 = arith.subf %8, %13 : vector<32x32xf32>
    %15 = arith.mulf %14, %14 : vector<32x32xf32>
    %cst_13 = arith.constant dense<0.000000e+00> : vector<32xf32>
    %16 = vector.multi_reduction <add>, %15, %cst_13 [1] : vector<32x32xf32> to vector<32xf32>
    %17 = vector.shape_cast %16 : vector<32xf32> to vector<32x1xf32>
    %cst_14 = arith.constant 3.200000e+01 : f32
    %18 = vector.broadcast %cst_14 : f32 to vector<32x1xf32>
    %19 = arith.divf %17, %18 : vector<32x1xf32>
    %20 = vector.broadcast %12 : vector<32x1xf32> to vector<32x32xf32>
    %21 = arith.subf %8, %20 : vector<32x32xf32>
    %cst_15 = arith.constant 9.99999974E-6 : f32
    %22 = vector.broadcast %cst_15 : f32 to vector<32x1xf32>
    %23 = arith.addf %19, %22 : vector<32x1xf32>
    %24 = math.rsqrt %23 : vector<32x1xf32>
    %25 = vector.broadcast %24 : vector<32x1xf32> to vector<32x32xf32>
    %26 = arith.mulf %21, %25 : vector<32x32xf32>
    %c0_16 = arith.constant 0 : index
    %c0_17 = arith.constant 0 : index
    %c0_18 = arith.constant 0 : index
    %27 = vector.load %arg5[%c0_16, %c0_17, %c0_18] : memref<2x1x32xf32, #tpu.memory_space<vmem>>, vector<1x1x32xf32>
    %28 = vector.shape_cast %27 : vector<1x1x32xf32> to vector<1x32xf32>
    %29 = vector.broadcast %28 : vector<1x32xf32> to vector<32x32xf32>
    %30 = arith.mulf %26, %29 : vector<32x32xf32>
    %c0_19 = arith.constant 0 : index
    %c0_20 = arith.constant 0 : index
    %c0_21 = arith.constant 0 : index
    %31 = vector.load %arg6[%c0_19, %c0_20, %c0_21] : memref<2x1x32xf32, #tpu.memory_space<vmem>>, vector<1x1x32xf32>
    %32 = vector.shape_cast %31 : vector<1x1x32xf32> to vector<1x32xf32>
    %33 = vector.broadcast %32 : vector<1x32xf32> to vector<32x32xf32>
    %34 = arith.addf %30, %33 : vector<32x32xf32>
    %35 = math.tanh %34 : vector<32x32xf32>
    %36 = vector.extract_strided_slice %6 {offsets = [0, 0, 0], sizes = [1, 32, 32], strides = [1, 1, 1]} : vector<4x32x32xf32> to vector<1x32x32xf32>
    %37 = vector.shape_cast %36 : vector<1x32x32xf32> to vector<32x32xf32>
    %cst_22 = arith.constant dense<0.000000e+00> : vector<32x32xf32>
    %38 = tpu.matmul %35, %37, %cst_22 {dimension_numbers = #tpu.dot_dimension_numbers<[1], [0], [0], [1], [0, 0, 1, 1], [], []>} : vector<32x32xf32>, vector<32x32xf32>, vector<32x32xf32> -> vector<32x32xf32>
    %c0_23 = arith.constant 0 : index
    %c0_24 = arith.constant 0 : index
    %c0_25 = arith.constant 0 : index
    %c0_26 = arith.constant 0 : index
    %39 = vector.load %arg3[%c0_23, %c0_24, %c0_25, %c0_26] : memref<1x3x32x32xf32, #tpu.memory_space<vmem>>, vector<1x1x32x32xf32>
    %40 = vector.shape_cast %39 : vector<1x1x32x32xf32> to vector<32x32xf32>
    %cst_27 = arith.constant dense<0.000000e+00> : vector<32x32xf32>
    %41 = tpu.matmul %40, %35, %cst_27 {dimension_numbers = #tpu.dot_dimension_numbers<[1], [0], [0], [1], [0, 0, 1, 1], [], []>} : vector<32x32xf32>, vector<32x32xf32>, vector<32x32xf32> -> vector<32x32xf32>
    %42 = vector.extract_strided_slice %6 {offsets = [1, 0, 0], sizes = [1, 32, 32], strides = [1, 1, 1]} : vector<4x32x32xf32> to vector<1x32x32xf32>
    %43 = vector.shape_cast %42 : vector<1x32x32xf32> to vector<32x32xf32>
    %cst_28 = arith.constant dense<0.000000e+00> : vector<32x32xf32>
    %44 = tpu.matmul %41, %43, %cst_28 {dimension_numbers = #tpu.dot_dimension_numbers<[1], [0], [0], [1], [0, 0, 1, 1], [], []>} : vector<32x32xf32>, vector<32x32xf32>, vector<32x32xf32> -> vector<32x32xf32>
    %45 = arith.addf %38, %44 : vector<32x32xf32>
    %c0_29 = arith.constant 0 : index
    %c1 = arith.constant 1 : index
    %c0_30 = arith.constant 0 : index
    %c0_31 = arith.constant 0 : index
    %46 = vector.load %arg3[%c0_29, %c1, %c0_30, %c0_31] : memref<1x3x32x32xf32, #tpu.memory_space<vmem>>, vector<1x1x32x32xf32>
    %47 = vector.shape_cast %46 : vector<1x1x32x32xf32> to vector<32x32xf32>
    %cst_32 = arith.constant dense<0.000000e+00> : vector<32x32xf32>
    %48 = tpu.matmul %47, %35, %cst_32 {dimension_numbers = #tpu.dot_dimension_numbers<[1], [0], [0], [1], [0, 0, 1, 1], [], []>} : vector<32x32xf32>, vector<32x32xf32>, vector<32x32xf32> -> vector<32x32xf32>
    %49 = vector.extract_strided_slice %6 {offsets = [2, 0, 0], sizes = [1, 32, 32], strides = [1, 1, 1]} : vector<4x32x32xf32> to vector<1x32x32xf32>
    %50 = vector.shape_cast %49 : vector<1x32x32xf32> to vector<32x32xf32>
    %cst_33 = arith.constant dense<0.000000e+00> : vector<32x32xf32>
    %51 = tpu.matmul %48, %50, %cst_33 {dimension_numbers = #tpu.dot_dimension_numbers<[1], [0], [0], [1], [0, 0, 1, 1], [], []>} : vector<32x32xf32>, vector<32x32xf32>, vector<32x32xf32> -> vector<32x32xf32>
    %52 = arith.addf %45, %51 : vector<32x32xf32>
    %c0_34 = arith.constant 0 : index
    %c2 = arith.constant 2 : index
    %c0_35 = arith.constant 0 : index
    %c0_36 = arith.constant 0 : index
    %53 = vector.load %arg3[%c0_34, %c2, %c0_35, %c0_36] : memref<1x3x32x32xf32, #tpu.memory_space<vmem>>, vector<1x1x32x32xf32>
    %54 = vector.shape_cast %53 : vector<1x1x32x32xf32> to vector<32x32xf32>
    %cst_37 = arith.constant dense<0.000000e+00> : vector<32x32xf32>
    %55 = tpu.matmul %54, %35, %cst_37 {dimension_numbers = #tpu.dot_dimension_numbers<[1], [0], [0], [1], [0, 0, 1, 1], [], []>} : vector<32x32xf32>, vector<32x32xf32>, vector<32x32xf32> -> vector<32x32xf32>
    %56 = vector.extract_strided_slice %6 {offsets = [3, 0, 0], sizes = [1, 32, 32], strides = [1, 1, 1]} : vector<4x32x32xf32> to vector<1x32x32xf32>
    %57 = vector.shape_cast %56 : vector<1x32x32xf32> to vector<32x32xf32>
    %cst_38 = arith.constant dense<0.000000e+00> : vector<32x32xf32>
    %58 = tpu.matmul %55, %57, %cst_38 {dimension_numbers = #tpu.dot_dimension_numbers<[1], [0], [0], [1], [0, 0, 1, 1], [], []>} : vector<32x32xf32>, vector<32x32xf32>, vector<32x32xf32> -> vector<32x32xf32>
    %59 = arith.addf %52, %58 : vector<32x32xf32>
    %60 = arith.addf %59, %35 : vector<32x32xf32>
    %c1_39 = arith.constant 1 : index
    %c0_40 = arith.constant 0 : index
    %c0_41 = arith.constant 0 : index
    %61 = vector.load %arg4[%c1_39, %c0_40, %c0_41] : memref<2x32x32xf32, #tpu.memory_space<vmem>>, vector<1x32x32xf32>
    %62 = vector.shape_cast %61 : vector<1x32x32xf32> to vector<32x32xf32>
    %c1_42 = arith.constant 1 : index
    %c0_43 = arith.constant 0 : index
    %c0_44 = arith.constant 0 : index
    %63 = vector.load %arg2[%c1_42, %c0_43, %c0_44] : memref<2x32x32xf32, #tpu.memory_space<vmem>>, vector<1x32x32xf32>
    %64 = vector.shape_cast %63 : vector<1x32x32xf32> to vector<32x32xf32>
    %c1_45 = arith.constant 1 : index
    %c0_46 = arith.constant 0 : index
    %c0_47 = arith.constant 0 : index
    %c0_48 = arith.constant 0 : index
    %65 = vector.load %arg7[%c1_45, %c0_46, %c0_47, %c0_48] : memref<2x4x32x32xf32, #tpu.memory_space<vmem>>, vector<1x4x32x32xf32>
    %66 = vector.shape_cast %65 : vector<1x4x32x32xf32> to vector<4x32x32xf32>
    %cst_49 = arith.constant dense<0.000000e+00> : vector<32x32xf32>
    %67 = tpu.matmul %60, %62, %cst_49 {dimension_numbers = #tpu.dot_dimension_numbers<[1], [0], [0], [1], [0, 0, 1, 1], [], []>} : vector<32x32xf32>, vector<32x32xf32>, vector<32x32xf32> -> vector<32x32xf32>
    %68 = arith.addf %67, %64 : vector<32x32xf32>
    %cst_50 = arith.constant dense<0.000000e+00> : vector<32xf32>
    %69 = vector.multi_reduction <add>, %68, %cst_50 [1] : vector<32x32xf32> to vector<32xf32>
    %70 = vector.shape_cast %69 : vector<32xf32> to vector<32x1xf32>
    %cst_51 = arith.constant 3.200000e+01 : f32
    %71 = vector.broadcast %cst_51 : f32 to vector<32x1xf32>
    %72 = arith.divf %70, %71 : vector<32x1xf32>
    %73 = vector.broadcast %72 : vector<32x1xf32> to vector<32x32xf32>
    %74 = arith.subf %68, %73 : vector<32x32xf32>
    %75 = arith.mulf %74, %74 : vector<32x32xf32>
    %cst_52 = arith.constant dense<0.000000e+00> : vector<32xf32>
    %76 = vector.multi_reduction <add>, %75, %cst_52 [1] : vector<32x32xf32> to vector<32xf32>
    %77 = vector.shape_cast %76 : vector<32xf32> to vector<32x1xf32>
    %cst_53 = arith.constant 3.200000e+01 : f32
    %78 = vector.broadcast %cst_53 : f32 to vector<32x1xf32>
    %79 = arith.divf %77, %78 : vector<32x1xf32>
    %80 = vector.broadcast %72 : vector<32x1xf32> to vector<32x32xf32>
    %81 = arith.subf %68, %80 : vector<32x32xf32>
    %cst_54 = arith.constant 9.99999974E-6 : f32
    %82 = vector.broadcast %cst_54 : f32 to vector<32x1xf32>
    %83 = arith.addf %79, %82 : vector<32x1xf32>
    %84 = math.rsqrt %83 : vector<32x1xf32>
    %85 = vector.broadcast %84 : vector<32x1xf32> to vector<32x32xf32>
    %86 = arith.mulf %81, %85 : vector<32x32xf32>
    %c1_55 = arith.constant 1 : index
    %c0_56 = arith.constant 0 : index
    %c0_57 = arith.constant 0 : index
    %87 = vector.load %arg5[%c1_55, %c0_56, %c0_57] : memref<2x1x32xf32, #tpu.memory_space<vmem>>, vector<1x1x32xf32>
    %88 = vector.shape_cast %87 : vector<1x1x32xf32> to vector<1x32xf32>
    %89 = vector.broadcast %88 : vector<1x32xf32> to vector<32x32xf32>
    %90 = arith.mulf %86, %89 : vector<32x32xf32>
    %c1_58 = arith.constant 1 : index
    %c0_59 = arith.constant 0 : index
    %c0_60 = arith.constant 0 : index
    %91 = vector.load %arg6[%c1_58, %c0_59, %c0_60] : memref<2x1x32xf32, #tpu.memory_space<vmem>>, vector<1x1x32xf32>
    %92 = vector.shape_cast %91 : vector<1x1x32xf32> to vector<1x32xf32>
    %93 = vector.broadcast %92 : vector<1x32xf32> to vector<32x32xf32>
    %94 = arith.addf %90, %93 : vector<32x32xf32>
    %95 = math.tanh %94 : vector<32x32xf32>
    %96 = vector.extract_strided_slice %66 {offsets = [0, 0, 0], sizes = [1, 32, 32], strides = [1, 1, 1]} : vector<4x32x32xf32> to vector<1x32x32xf32>
    %97 = vector.shape_cast %96 : vector<1x32x32xf32> to vector<32x32xf32>
    %cst_61 = arith.constant dense<0.000000e+00> : vector<32x32xf32>
    %98 = tpu.matmul %95, %97, %cst_61 {dimension_numbers = #tpu.dot_dimension_numbers<[1], [0], [0], [1], [0, 0, 1, 1], [], []>} : vector<32x32xf32>, vector<32x32xf32>, vector<32x32xf32> -> vector<32x32xf32>
    %c0_62 = arith.constant 0 : index
    %c0_63 = arith.constant 0 : index
    %c0_64 = arith.constant 0 : index
    %c0_65 = arith.constant 0 : index
    %99 = vector.load %arg3[%c0_62, %c0_63, %c0_64, %c0_65] : memref<1x3x32x32xf32, #tpu.memory_space<vmem>>, vector<1x1x32x32xf32>
    %100 = vector.shape_cast %99 : vector<1x1x32x32xf32> to vector<32x32xf32>
    %cst_66 = arith.constant dense<0.000000e+00> : vector<32x32xf32>
    %101 = tpu.matmul %100, %95, %cst_66 {dimension_numbers = #tpu.dot_dimension_numbers<[1], [0], [0], [1], [0, 0, 1, 1], [], []>} : vector<32x32xf32>, vector<32x32xf32>, vector<32x32xf32> -> vector<32x32xf32>
    %102 = vector.extract_strided_slice %66 {offsets = [1, 0, 0], sizes = [1, 32, 32], strides = [1, 1, 1]} : vector<4x32x32xf32> to vector<1x32x32xf32>
    %103 = vector.shape_cast %102 : vector<1x32x32xf32> to vector<32x32xf32>
    %cst_67 = arith.constant dense<0.000000e+00> : vector<32x32xf32>
    %104 = tpu.matmul %101, %103, %cst_67 {dimension_numbers = #tpu.dot_dimension_numbers<[1], [0], [0], [1], [0, 0, 1, 1], [], []>} : vector<32x32xf32>, vector<32x32xf32>, vector<32x32xf32> -> vector<32x32xf32>
    %105 = arith.addf %98, %104 : vector<32x32xf32>
    %c0_68 = arith.constant 0 : index
    %c1_69 = arith.constant 1 : index
    %c0_70 = arith.constant 0 : index
    %c0_71 = arith.constant 0 : index
    %106 = vector.load %arg3[%c0_68, %c1_69, %c0_70, %c0_71] : memref<1x3x32x32xf32, #tpu.memory_space<vmem>>, vector<1x1x32x32xf32>
    %107 = vector.shape_cast %106 : vector<1x1x32x32xf32> to vector<32x32xf32>
    %cst_72 = arith.constant dense<0.000000e+00> : vector<32x32xf32>
    %108 = tpu.matmul %107, %95, %cst_72 {dimension_numbers = #tpu.dot_dimension_numbers<[1], [0], [0], [1], [0, 0, 1, 1], [], []>} : vector<32x32xf32>, vector<32x32xf32>, vector<32x32xf32> -> vector<32x32xf32>
    %109 = vector.extract_strided_slice %66 {offsets = [2, 0, 0], sizes = [1, 32, 32], strides = [1, 1, 1]} : vector<4x32x32xf32> to vector<1x32x32xf32>
    %110 = vector.shape_cast %109 : vector<1x32x32xf32> to vector<32x32xf32>
    %cst_73 = arith.constant dense<0.000000e+00> : vector<32x32xf32>
    %111 = tpu.matmul %108, %110, %cst_73 {dimension_numbers = #tpu.dot_dimension_numbers<[1], [0], [0], [1], [0, 0, 1, 1], [], []>} : vector<32x32xf32>, vector<32x32xf32>, vector<32x32xf32> -> vector<32x32xf32>
    %112 = arith.addf %105, %111 : vector<32x32xf32>
    %c0_74 = arith.constant 0 : index
    %c2_75 = arith.constant 2 : index
    %c0_76 = arith.constant 0 : index
    %c0_77 = arith.constant 0 : index
    %113 = vector.load %arg3[%c0_74, %c2_75, %c0_76, %c0_77] : memref<1x3x32x32xf32, #tpu.memory_space<vmem>>, vector<1x1x32x32xf32>
    %114 = vector.shape_cast %113 : vector<1x1x32x32xf32> to vector<32x32xf32>
    %cst_78 = arith.constant dense<0.000000e+00> : vector<32x32xf32>
    %115 = tpu.matmul %114, %95, %cst_78 {dimension_numbers = #tpu.dot_dimension_numbers<[1], [0], [0], [1], [0, 0, 1, 1], [], []>} : vector<32x32xf32>, vector<32x32xf32>, vector<32x32xf32> -> vector<32x32xf32>
    %116 = vector.extract_strided_slice %66 {offsets = [3, 0, 0], sizes = [1, 32, 32], strides = [1, 1, 1]} : vector<4x32x32xf32> to vector<1x32x32xf32>
    %117 = vector.shape_cast %116 : vector<1x32x32xf32> to vector<32x32xf32>
    %cst_79 = arith.constant dense<0.000000e+00> : vector<32x32xf32>
    %118 = tpu.matmul %115, %117, %cst_79 {dimension_numbers = #tpu.dot_dimension_numbers<[1], [0], [0], [1], [0, 0, 1, 1], [], []>} : vector<32x32xf32>, vector<32x32xf32>, vector<32x32xf32> -> vector<32x32xf32>
    %119 = arith.addf %112, %118 : vector<32x32xf32>
    %120 = arith.addf %119, %95 : vector<32x32xf32>
    %121 = vector.shape_cast %120 : vector<32x32xf32> to vector<2x16x32xf32>
    %c0_80 = arith.constant 0 : index
    %c0_81 = arith.constant 0 : index
    %122 = vector.load %arg8[%c0_80, %c0_81] : memref<1x32xf32, #tpu.memory_space<vmem>>, vector<1x32xf32>
    %123 = vector.broadcast %122 : vector<1x32xf32> to vector<32x32xf32>
    %124 = arith.mulf %120, %123 : vector<32x32xf32>
    %125 = vector.shape_cast %124 : vector<32x32xf32> to vector<2x16x32xf32>
    %cst_82 = arith.constant dense<0.000000e+00> : vector<2x16x16xf32>
    %126 = tpu.matmul %125, %121, %cst_82 {dimension_numbers = #tpu.dot_dimension_numbers<[2], [2], [1], [1], [0, 0, 0, 1, 1, 1], [0], [0]>} : vector<2x16x32xf32>, vector<2x16x32xf32>, vector<2x16x16xf32> -> vector<2x16x16xf32>
    %127 = vector.shape_cast %126 : vector<2x16x16xf32> to vector<1x2x256xf32>
    %c0_83 = arith.constant 0 : index
    %c0_84 = arith.constant 0 : index
    %c0_85 = arith.constant 0 : index
    %128 = vector.load %arg9[%c0_83, %c0_84, %c0_85] : memref<1x2x256xf32, #tpu.memory_space<vmem>>, vector<1x2x256xf32>
    tpu.vector_store %arg9[%c0_83, %c0_84, %c0_85], %127 {strides = array<i32>} : memref<1x2x256xf32, #tpu.memory_space<vmem>>, vector<1x2x256xf32>,
    return
  }
  func.func @transform_0(%arg0: i32) -> (i32, i32) {
    %c0_i32 = arith.constant 0 : i32
    %c0_i32_0 = arith.constant 0 : i32
    return %arg0, %c0_i32 : i32, i32
  }
  func.func @transform_1(%arg0: i32) -> (i32, i32, i32) {
    %c0_i32 = arith.constant 0 : i32
    %c0_i32_0 = arith.constant 0 : i32
    %c0_i32_1 = arith.constant 0 : i32
    return %c0_i32, %arg0, %c0_i32_0 : i32, i32, i32
  }
  func.func @transform_2(%arg0: i32) -> (i32, i32, i32, i32) {
    %c0_i32 = arith.constant 0 : i32
    %c0_i32_0 = arith.constant 0 : i32
    %c0_i32_1 = arith.constant 0 : i32
    %c0_i32_2 = arith.constant 0 : i32
    return %arg0, %c0_i32, %c0_i32_0, %c0_i32_1 : i32, i32, i32, i32
  }
  func.func @transform_3(%arg0: i32) -> (i32, i32, i32) {
    %c0_i32 = arith.constant 0 : i32
    %c0_i32_0 = arith.constant 0 : i32
    %c0_i32_1 = arith.constant 0 : i32
    %c0_i32_2 = arith.constant 0 : i32
    return %c0_i32, %c0_i32_0, %c0_i32_1 : i32, i32, i32
  }
  func.func @transform_4(%arg0: i32) -> (i32, i32, i32) {
    %c0_i32 = arith.constant 0 : i32
    %c0_i32_0 = arith.constant 0 : i32
    %c0_i32_1 = arith.constant 0 : i32
    %c0_i32_2 = arith.constant 0 : i32
    return %c0_i32, %c0_i32_0, %c0_i32_1 : i32, i32, i32
  }
  func.func @transform_5(%arg0: i32) -> (i32, i32, i32) {
    %c0_i32 = arith.constant 0 : i32
    %c0_i32_0 = arith.constant 0 : i32
    %c0_i32_1 = arith.constant 0 : i32
    %c0_i32_2 = arith.constant 0 : i32
    return %c0_i32, %c0_i32_0, %c0_i32_1 : i32, i32, i32
  }
  func.func @transform_6(%arg0: i32) -> (i32, i32, i32, i32) {
    %c0_i32 = arith.constant 0 : i32
    %c0_i32_0 = arith.constant 0 : i32
    %c0_i32_1 = arith.constant 0 : i32
    %c0_i32_2 = arith.constant 0 : i32
    %c0_i32_3 = arith.constant 0 : i32
    return %c0_i32, %c0_i32_0, %c0_i32_1, %c0_i32_2 : i32, i32, i32, i32
  }
  func.func @transform_7(%arg0: i32) -> (i32, i32) {
    %c0_i32 = arith.constant 0 : i32
    %c0_i32_0 = arith.constant 0 : i32
    %c0_i32_1 = arith.constant 0 : i32
    return %c0_i32, %c0_i32_0 : i32, i32
  }
  func.func @transform_8(%arg0: i32) -> (i32, i32, i32) {
    %c0_i32 = arith.constant 0 : i32
    %c0_i32_0 = arith.constant 0 : i32
    %c0_i32_1 = arith.constant 0 : i32
    return %arg0, %c0_i32, %c0_i32_0 : i32, i32, i32
  }
}

</mosaic_0001>

<llo_original>
// kernel: rgcn_forward.1
$region0: #{rgcn_forward.1}
  #allocation0 [shape = 'u32[]', space=smem, size = 0x4, offset = 0x4, fixed_abs, tag = 'smem constant byte address 0x4 - core index']
  #allocation1 [shape = 'u32[144,128]{1,0:T(1,128)}', space=vmem, size = 0x12000, scoped, tag = 'internal scratch']
  %s0 = inlined_call_operand.vmem [shape: f32[64,32], index: 0, kind: input, shape index: {}]
  %s1 = inlined_call_operand.vmem [shape: f32[2,64,32], index: 1, kind: input, shape index: {}]
  %s2 = inlined_call_operand.vmem [shape: f32[2,3,32,32], index: 2, kind: input, shape index: {}]
  %s3 = inlined_call_operand.vmem [shape: f32[2,32,32], index: 3, kind: input, shape index: {}]
  %s4 = inlined_call_operand.vmem [shape: f32[2,1,32], index: 4, kind: input, shape index: {}]
  %s5 = inlined_call_operand.vmem [shape: f32[2,1,32], index: 5, kind: input, shape index: {}]
  %s6 = inlined_call_operand.vmem [shape: f32[2,4,32,32], index: 6, kind: input, shape index: {}]
  %s7 = inlined_call_operand.vmem [shape: f32[1,32], index: 7, kind: input, shape index: {}]
  %s8 = inlined_call_operand.vmem [shape: f32[2,2,256], index: 8, kind: output, shape index: {}]
  %s9 = sld [smem:[#allocation0]]
  $region103: #{rgcn_forward.1} parent=0
    _
  %s11 = ssub.s32 1, %s9
  %s12 = scalar_select 0, %s11, %s9
  $region1: #{rgcn_forward.1} parent=0
    #allocation2 [shape = 'u8[65536]{0}', space=vmem, size = 0x10000, scoped, tag = 'input window, operand 1']
    loop: start=0, step=1, limit=4
    $region2: #{rgcn_forward.1} parent=1 // loop_pre_header
      _
    $region3: #{rgcn_forward.1} parent=1 // loop_header
      %s14 = sphi 0, %s18
      %p15 = scmp.ge.s32.totalorder %s14, 4
      %s24 = sphi 0, %s26
      %s27 = sphi 0, %s24
      %s28 = sphi 0, %s27
      %s44 = sphi 0, %s28
      %s50 = sphi 0, %s52
      %s53 = sphi 0, %s50
      %s54 = sphi 0, %s53
      %s70 = sphi 0, %s54
      %s76 = sphi 0, %s78
      %s79 = sphi 0, %s76
      %s80 = sphi 0, %s79
      %s96 = sphi 0, %s80
      %s100 = sphi 0, %s100
      %s102 = sphi 0, %s100
      %s103 = sphi 0, %s102
      %s117 = sphi 0, %s103
      %s121 = sphi 0, %s121
      %s123 = sphi 0, %s121
      %s124 = sphi 0, %s123
      %s138 = sphi 0, %s124
      %s142 = sphi 0, %s142
      %s144 = sphi 0, %s142
      %s145 = sphi 0, %s144
      %s159 = sphi 0, %s145
      %s163 = sphi 0, %s163
      %s165 = sphi 0, %s163
      %s166 = sphi 0, %s165
      %s180 = sphi 0, %s166
      %s184 = sphi 0, %s184
      %s186 = sphi 0, %s184
      %s187 = sphi 0, %s186
      %s201 = sphi 0, %s187
      %s207 = sphi 0, %s209
      %s210 = sphi 0, %s207
      %s211 = sphi 0, %s210
      %s227 = sphi 0, %s211
    $region4: #{rgcn_forward.1} parent=1 // loop_header_branch
      %17 = sbr.rel (%p15) target = $region8
    $region5: #{rgcn_forward.1} parent=1 // loop_body
      %s19 = ssub.s32 %s14, 1
      %s20 = ssub.s32 %s14, 2
      %s21 = sadd.s32 %s14, 1
      %s22 = ssub.s32 %s14, %s21
      %p23 = scmp.eq.s32.totalorder %s22, 0
      %s25 = sadd.s32 %s24, 1
      %s26 = scalar_select %p23, %s24, %s25
      %p29 = pneg %p23
      %p30 = scmp.eq.s32.totalorder %s14, 1
      %p31 = por %p29, %p30
      %p32 = scmp.ne.s32.totalorder %s24, %s27
      %p33 = scmp.eq.s32.totalorder %s14, 0
      %p34 = por %p32, %p33
      %p35 = scmp.ne.s32.totalorder %s24, %s27
      %p36 = scmp.eq.s32.totalorder %s19, 1
      %p37 = por %p35, %p36
      %p38 = scmp.ne.s32.totalorder %s27, %s28
      %p39 = scmp.eq.s32.totalorder %s19, 0
      %p40 = por %p38, %p39
      %p41 = scmp.ne.s32.totalorder %s27, %s28
      %p42 = scmp.eq.s32.totalorder %s20, 1
      %p43 = por %p41, %p42
      %p45 = scmp.ne.s32.totalorder %s28, %s44
      %p46 = scmp.eq.s32.totalorder %s20, 0
      %p47 = por %p45, %p46
      %s48 = ssub.s32 %s14, %s21
      %p49 = scmp.eq.s32.totalorder %s48, 0
      %s51 = sadd.s32 %s50, 1
      %s52 = scalar_select %p49, %s50, %s51
      %p55 = pneg %p49
      %p56 = scmp.eq.s32.totalorder %s14, 1
      %p57 = por %p55, %p56
      %p58 = scmp.ne.s32.totalorder %s50, %s53
      %p59 = scmp.eq.s32.totalorder %s14, 0
      %p60 = por %p58, %p59
      %p61 = scmp.ne.s32.totalorder %s50, %s53
      %p62 = scmp.eq.s32.totalorder %s19, 1
      %p63 = por %p61, %p62
      %p64 = scmp.ne.s32.totalorder %s53, %s54
      %p65 = scmp.eq.s32.totalorder %s19, 0
      %p66 = por %p64, %p65
      %p67 = scmp.ne.s32.totalorder %s53, %s54
      %p68 = scmp.eq.s32.totalorder %s20, 1
      %p69 = por %p67, %p68
      %p71 = scmp.ne.s32.totalorder %s54, %s70
      %p72 = scmp.eq.s32.totalorder %s20, 0
      %p73 = por %p71, %p72
      %s74 = ssub.s32 %s14, %s21
      %p75 = scmp.eq.s32.totalorder %s74, 0
      %s77 = sadd.s32 %s76, 1
      %s78 = scalar_select %p75, %s76, %s77
      %p81 = pneg %p75
      %p82 = scmp.eq.s32.totalorder %s14, 1
      %p83 = por %p81, %p82
      %p84 = scmp.ne.s32.totalorder %s76, %s79
      %p85 = scmp.eq.s32.totalorder %s14, 0
      %p86 = por %p84, %p85
      %p87 = scmp.ne.s32.totalorder %s76, %s79
      %p88 = scmp.eq.s32.totalorder %s19, 1
      %p89 = por %p87, %p88
      %p90 = scmp.ne.s32.totalorder %s79, %s80
      %p91 = scmp.eq.s32.totalorder %s19, 0
      %p92 = por %p90, %p91
      %p93 = scmp.ne.s32.totalorder %s79, %s80
      %p94 = scmp.eq.s32.totalorder %s20, 1
      %p95 = por %p93, %p94
      %p97 = scmp.ne.s32.totalorder %s80, %s96
      %p98 = scmp.eq.s32.totalorder %s20, 0
      %p99 = por %p97, %p98
      %s101 = sadd.s32 %s100, 1
      %p104 = scmp.eq.s32.totalorder %s14, 1
      %p105 = scmp.ne.s32.totalorder %s100, %s102
      %p106 = scmp.eq.s32.totalorder %s14, 0
      %p107 = por %p105, %p106
      %p108 = scmp.ne.s32.totalorder %s100, %s102
      %p109 = scmp.eq.s32.totalorder %s19, 1
      %p110 = por %p108, %p109
      %p111 = scmp.ne.s32.totalorder %s102, %s103
      %p112 = scmp.eq.s32.totalorder %s19, 0
      %p113 = por %p111, %p112
      %p114 = scmp.ne.s32.totalorder %s102, %s103
      %p115 = scmp.eq.s32.totalorder %s20, 1
      %p116 = por %p114, %p115
      %p118 = scmp.ne.s32.totalorder %s103, %s117
      %p119 = scmp.eq.s32.totalorder %s20, 0
      %p120 = por %p118, %p119
      %s122 = sadd.s32 %s121, 1
      %p125 = scmp.eq.s32.totalorder %s14, 1
      %p126 = scmp.ne.s32.totalorder %s121, %s123
      %p127 = scmp.eq.s32.totalorder %s14, 0
      %p128 = por %p126, %p127
      %p129 = scmp.ne.s32.totalorder %s121, %s123
      %p130 = scmp.eq.s32.totalorder %s19, 1
      %p131 = por %p129, %p130
      %p132 = scmp.ne.s32.totalorder %s123, %s124
      %p133 = scmp.eq.s32.totalorder %s19, 0
      %p134 = por %p132, %p133
      %p135 = scmp.ne.s32.totalorder %s123, %s124
      %p136 = scmp.eq.s32.totalorder %s20, 1
      %p137 = por %p135, %p136
      %p139 = scmp.ne.s32.totalorder %s124, %s138
      %p140 = scmp.eq.s32.totalorder %s20, 0
      %p141 = por %p139, %p140
      %s143 = sadd.s32 %s142, 1
      %p146 = scmp.eq.s32.totalorder %s14, 1
      %p147 = scmp.ne.s32.totalorder %s142, %s144
      %p148 = scmp.eq.s32.totalorder %s14, 0
      %p149 = por %p147, %p148
      %p150 = scmp.ne.s32.totalorder %s142, %s144
      %p151 = scmp.eq.s32.totalorder %s19, 1
      %p152 = por %p150, %p151
      %p153 = scmp.ne.s32.totalorder %s144, %s145
      %p154 = scmp.eq.s32.totalorder %s19, 0
      %p155 = por %p153, %p154
      %p156 = scmp.ne.s32.totalorder %s144, %s145
      %p157 = scmp.eq.s32.totalorder %s20, 1
      %p158 = por %p156, %p157
      %p160 = scmp.ne.s32.totalorder %s145, %s159
      %p161 = scmp.eq.s32.totalorder %s20, 0
      %p162 = por %p160, %p161
      %s164 = sadd.s32 %s163, 1
      %p167 = scmp.eq.s32.totalorder %s14, 1
      %p168 = scmp.ne.s32.totalorder %s163, %s165
      %p169 = scmp.eq.s32.totalorder %s14, 0
      %p170 = por %p168, %p169
      %p171 = scmp.ne.s32.totalorder %s163, %s165
      %p172 = scmp.eq.s32.totalorder %s19, 1
      %p173 = por %p171, %p172
      %p174 = scmp.ne.s32.totalorder %s165, %s166
      %p175 = scmp.eq.s32.totalorder %s19, 0
      %p176 = por %p174, %p175
      %p177 = scmp.ne.s32.totalorder %s165, %s166
      %p178 = scmp.eq.s32.totalorder %s20, 1
      %p179 = por %p177, %p178
      %p181 = scmp.ne.s32.totalorder %s166, %s180
      %p182 = scmp.eq.s32.totalorder %s20, 0
      %p183 = por %p181, %p182
      %s185 = sadd.s32 %s184, 1
      %p188 = scmp.eq.s32.totalorder %s14, 1
      %p189 = scmp.ne.s32.totalorder %s184, %s186
      %p190 = scmp.eq.s32.totalorder %s14, 0
      %p191 = por %p189, %p190
      %p192 = scmp.ne.s32.totalorder %s184, %s186
      %p193 = scmp.eq.s32.totalorder %s19, 1
      %p194 = por %p192, %p193
      %p195 = scmp.ne.s32.totalorder %s186, %s187
      %p196 = scmp.eq.s32.totalorder %s19, 0
      %p197 = por %p195, %p196
      %p198 = scmp.ne.s32.totalorder %s186, %s187
      %p199 = scmp.eq.s32.totalorder %s20, 1
      %p200 = por %p198, %p199
      %p202 = scmp.ne.s32.totalorder %s187, %s201
      %p203 = scmp.eq.s32.totalorder %s20, 0
      %p204 = por %p202, %p203
      %s205 = ssub.s32 %s14, %s21
      %p206 = scmp.eq.s32.totalorder %s205, 0
      %s208 = sadd.s32 %s207, 1
      %s209 = scalar_select %p206, %s207, %s208
      %p212 = pneg %p206
      %p213 = scmp.eq.s32.totalorder %s14, 1
      %p214 = por %p212, %p213
      %p215 = scmp.ne.s32.totalorder %s207, %s210
      %p216 = scmp.eq.s32.totalorder %s14, 0
      %p217 = por %p215, %p216
      %p218 = scmp.ne.s32.totalorder %s207, %s210
      %p219 = scmp.eq.s32.totalorder %s19, 1
      %p220 = por %p218, %p219
      %p221 = scmp.ne.s32.totalorder %s210, %s211
      %p222 = scmp.eq.s32.totalorder %s19, 0
      %p223 = por %p221, %p222
      %p224 = scmp.ne.s32.totalorder %s210, %s211
      %p225 = scmp.eq.s32.totalorder %s20, 1
      %p226 = por %p224, %p225
      %p228 = scmp.ne.s32.totalorder %s211, %s227
      %p229 = scmp.eq.s32.totalorder %s20, 0
      %p230 = por %p228, %p229
      %p231 = scmp.le.s32.totalorder 1, %s14
      %p232 = scmp.lt.s32.totalorder %s14, 3
      %p233 = pnand %p231, %p232
      %p234 = pneg %p233
      // Predicated region
      $region9: #{rgcn_forward.1} parent=5 // pred_check
        _
      $region10: #{rgcn_forward.1} parent=5 // pred_check_branch
        %236 = sbr.rel (%p233) target = $region12
      $region11: #{rgcn_forward.1} parent=5 // pred_region
        %s237 = ssub.s32 %s14, 1
        // Predicated region
        $region13: #{rgcn_forward.1} parent=11 // pred_check
          %p238 = pneg %p113
        $region14: #{rgcn_forward.1} parent=11 // pred_check_branch
          %240 = sbr.rel (%p238) target = $region16
        $region15: #{rgcn_forward.1} parent=11 // pred_region
          _
        $region16: #{rgcn_forward.1} parent=11 // pred_fallthru
          _
        // Predicated region
        $region17: #{rgcn_forward.1} parent=11 // pred_check
          %p241 = pneg %p134
        $region18: #{rgcn_forward.1} parent=11 // pred_check_branch
          %243 = sbr.rel (%p241) target = $region20
        $region19: #{rgcn_forward.1} parent=11 // pred_region
          _
        $region20: #{rgcn_forward.1} parent=11 // pred_fallthru
          _
        // Predicated region
        $region21: #{rgcn_forward.1} parent=11 // pred_check
          %p244 = pneg %p155
        $region22: #{rgcn_forward.1} parent=11 // pred_check_branch
          %246 = sbr.rel (%p244) target = $region24
        $region23: #{rgcn_forward.1} parent=11 // pred_region
          _
        $region24: #{rgcn_forward.1} parent=11 // pred_fallthru
          _
        // Predicated region
        $region25: #{rgcn_forward.1} parent=11 // pred_check
          %p247 = pneg %p176
        $region26: #{rgcn_forward.1} parent=11 // pred_check_branch
          %249 = sbr.rel (%p247) target = $region28
        $region27: #{rgcn_forward.1} parent=11 // pred_region
          _
        $region28: #{rgcn_forward.1} parent=11 // pred_fallthru
          _
        // Predicated region
        $region29: #{rgcn_forward.1} parent=11 // pred_check
          %p250 = pneg %p197
        $region30: #{rgcn_forward.1} parent=11 // pred_check_branch
          %252 = sbr.rel (%p250) target = $region32
        $region31: #{rgcn_forward.1} parent=11 // pred_region
          _
        $region32: #{rgcn_forward.1} parent=11 // pred_fallthru
          _
      $region12: #{rgcn_forward.1} parent=5 // pred_fallthru
        _
      %p253 = scmp.lt.s32.totalorder %s14, 2
      // Predicated region
      $region33: #{rgcn_forward.1} parent=5 // pred_check
        %p254 = pneg %p253
      $region34: #{rgcn_forward.1} parent=5 // pred_check_branch
        %256 = sbr.rel (%p254) target = $region36
      $region35: #{rgcn_forward.1} parent=5 // pred_region
        // Predicated region
        $region37: #{rgcn_forward.1} parent=35 // pred_check
          %p257 = pneg %p34
        $region38: #{rgcn_forward.1} parent=35 // pred_check_branch
          %259 = sbr.rel (%p257) target = $region40
        $region39: #{rgcn_forward.1} parent=35 // pred_region
          %s260 = smul.u32 4, %s14
          %p261 = scmp.lt.s32.totalorder %s260, 7
          %s262 = scalar_select %p261, %s260, 7
          %s263 = smul.addr %s262, 8
          %s264 = scalar_lea.vmem %s0, %s263
          %s265 = smul.u32 4, %s14
        $region40: #{rgcn_forward.1} parent=35 // pred_fallthru
          _
        // Predicated region
        $region41: #{rgcn_forward.1} parent=35 // pred_check
          %p266 = pneg %p60
        $region42: #{rgcn_forward.1} parent=35 // pred_check_branch
          %268 = sbr.rel (%p266) target = $region44
        $region43: #{rgcn_forward.1} parent=35 // pred_region
          %s269 = sand.u32 %s50, 1
          %s270 = sand.u32 %s50, 1
          %s271 = smul.addr %s270, 64
          %s272 = scalar_lea.vmem [#allocation2], %s271
          %s273 = smul.u32 4, %s14
          %s274 = smul.addr %s273, 8
          %s275 = scalar_lea.vmem %s1, %s274
          // Predicated region
          $region45: #{rgcn_forward.1} parent=43 // pred_check
            _
          $region46: #{rgcn_forward.1} parent=43 // pred_check_branch
            %277 = sbr.rel (0) target = $region48
          $region47: #{rgcn_forward.1} parent=43 // pred_region
            // Predicated region
            $region49: #{rgcn_forward.1} parent=47 // pred_check
              _
            $region50: #{rgcn_forward.1} parent=47 // pred_check_branch
              %279 = sbr.rel (0) target = $region52
            $region51: #{rgcn_forward.1} parent=47 // pred_region
              // Predicated region
              $region64: #{rgcn_forward.1} parent=51 // pred_check
                _
              $region65: #{rgcn_forward.1} parent=51 // pred_check_branch
                %309 = sbr.rel (0) target = $region67
              $region66: #{rgcn_forward.1} parent=51 // pred_region
                loop: start=0, step=1, limit=1
                $region68: #{rgcn_forward.1} parent=66 // loop_pre_header
                  _
                $region69: #{rgcn_forward.1} parent=66 // loop_header
                  %s311 = sphi 0, %s315
                  %p312 = scmp.ge.s32.totalorder %s311, 1
                  %s316 = sphi %s275, %s275
                  %s317 = sphi %s272, %s272
                $region70: #{rgcn_forward.1} parent=66 // loop_header_branch
                  %314 = sbr.rel (%p312) target = $region74
                $region71: #{rgcn_forward.1} parent=66 // loop_body
                  %v318 = vld [vmem:[%s316] sm:$0xff]
                  %319 = vst [vmem:[%s317] sm:$0xff] %v318
                  %v320 = vld [vmem:[%s316 + $0x8] sm:$0xff]
                  %321 = vst [vmem:[%s317 + $0x8] sm:$0xff] %v320
                  %v322 = vld [vmem:[%s316 + $0x10] sm:$0xff]
                  %323 = vst [vmem:[%s317 + $0x10] sm:$0xff] %v322
                  %v324 = vld [vmem:[%s316 + $0x18] sm:$0xff]
                  %325 = vst [vmem:[%s317 + $0x18] sm:$0xff] %v324
                  %v326 = vld [vmem:[%s316 + $0x40] sm:$0xff]
                  %327 = vst [vmem:[%s317 + $0x20] sm:$0xff] %v326
                  %v328 = vld [vmem:[%s316 + $0x48] sm:$0xff]
                  %329 = vst [vmem:[%s317 + $0x28] sm:$0xff] %v328
                  %v330 = vld [vmem:[%s316 + $0x50] sm:$0xff]
                  %331 = vst [vmem:[%s317 + $0x30] sm:$0xff] %v330
                  %v332 = vld [vmem:[%s316 + $0x58] sm:$0xff]
                  %333 = vst [vmem:[%s317 + $0x38] sm:$0xff] %v332
                $region72: #{rgcn_forward.1} parent=66 // loop_footer
                  %s315 = sadd.s32 1, %s311
                $region73: #{rgcn_forward.1} parent=66 // loop_footer_branch
                  %310 = sbr.rel target = $region69
                $region74: #{rgcn_forward.1} parent=66 // loop_exit
                  _
              $region67: #{rgcn_forward.1} parent=51 // pred_fallthru
                _
              // Predicated region
              $region75: #{rgcn_forward.1} parent=51 // pred_check
                _
              $region76: #{rgcn_forward.1} parent=51 // pred_check_branch
                %335 = sbr.rel target = $region78
              $region77: #{rgcn_forward.1} parent=51 // pred_region
                _
              $region78: #{rgcn_forward.1} parent=51 // pred_fallthru
                _
            $region52: #{rgcn_forward.1} parent=47 // pred_fallthru
              _
            // Predicated region
            $region53: #{rgcn_forward.1} parent=47 // pred_check
              _
            $region54: #{rgcn_forward.1} parent=47 // pred_check_branch
              %281 = sbr.rel target = $region56
            $region55: #{rgcn_forward.1} parent=47 // pred_region
              %s283 = ssub.s32 256, 1
              loop: start=0, step=1, limit=1
              $region57: #{rgcn_forward.1} parent=55 // loop_pre_header
                _
              $region58: #{rgcn_forward.1} parent=55 // loop_header
                %s285 = sphi 0, %s289
                %p286 = scmp.ge.s32.totalorder %s285, 1
                %s290 = sphi %s275, %s275
                %s291 = sphi %s272, %s272
              $region59: #{rgcn_forward.1} parent=55 // loop_header_branch
                %288 = sbr.rel (%p286) target = $region63
              $region60: #{rgcn_forward.1} parent=55 // loop_body
                %v292 = vld [vmem:[%s290] sm:%s283]
                %293 = vst [vmem:[%s291] sm:%s283] %v292
                %v294 = vld [vmem:[%s290 + $0x8] sm:%s283]
                %295 = vst [vmem:[%s291 + $0x8] sm:%s283] %v294
                %v296 = vld [vmem:[%s290 + $0x10] sm:%s283]
                %297 = vst [vmem:[%s291 + $0x10] sm:%s283] %v296
                %v298 = vld [vmem:[%s290 + $0x18] sm:%s283]
                %299 = vst [vmem:[%s291 + $0x18] sm:%s283] %v298
                %v300 = vld [vmem:[%s290 + $0x40] sm:%s283]
                %301 = vst [vmem:[%s291 + $0x20] sm:%s283] %v300
                %v302 = vld [vmem:[%s290 + $0x48] sm:%s283]
                %303 = vst [vmem:[%s291 + $0x28] sm:%s283] %v302
                %v304 = vld [vmem:[%s290 + $0x50] sm:%s283]
                %305 = vst [vmem:[%s291 + $0x30] sm:%s283] %v304
                %v306 = vld [vmem:[%s290 + $0x58] sm:%s283]
                %307 = vst [vmem:[%s291 + $0x38] sm:%s283] %v306
              $region61: #{rgcn_forward.1} parent=55 // loop_footer
                %s289 = sadd.s32 1, %s285
              $region62: #{rgcn_forward.1} parent=55 // loop_footer_branch
                %284 = sbr.rel target = $region58
              $region63: #{rgcn_forward.1} parent=55 // loop_exit
                _
            $region56: #{rgcn_forward.1} parent=47 // pred_fallthru
              _
          $region48: #{rgcn_forward.1} parent=43 // pred_fallthru
            _
          %336 = vnop
        $region44: #{rgcn_forward.1} parent=35 // pred_fallthru
          _
        // Predicated region
        $region79: #{rgcn_forward.1} parent=35 // pred_check
          %p337 = pneg %p86
        $region80: #{rgcn_forward.1} parent=35 // pred_check_branch
          %339 = sbr.rel (%p337) target = $region82
        $region81: #{rgcn_forward.1} parent=35 // pred_region
          %p340 = scmp.lt.s32.totalorder %s14, 1
          %s341 = scalar_select %p340, %s14, 1
          %s342 = smul.addr %s341, 12
          %s343 = smul.addr %s342, 8
          %s344 = scalar_lea.vmem %s2, %s343
        $region82: #{rgcn_forward.1} parent=35 // pred_fallthru
          _
      $region36: #{rgcn_forward.1} parent=5 // pred_fallthru
        _
      %p345 = scmp.le.s32.totalorder 1, %s14
      %p346 = scmp.lt.s32.totalorder %s14, 3
      %p347 = pnand %p345, %p346
      %p348 = pneg %p347
      // Predicated region
      $region83: #{rgcn_forward.1} parent=5 // pred_check
        _
      $region84: #{rgcn_forward.1} parent=5 // pred_check_branch
        %350 = sbr.rel (%p347) target = $region86
      $region85: #{rgcn_forward.1} parent=5 // pred_region
        %s351 = ssub.s32 %s14, 1
        %s352 = sand.u32 %s53, 1
        %s353 = sand.u32 %s53, 1
        %s354 = smul.addr %s353, 64
        %s355 = scalar_lea.vmem [#allocation2], %s354
        // Predicated region
        $region87: #{rgcn_forward.1} parent=85 // pred_check
          %p356 = pneg %p66
        $region88: #{rgcn_forward.1} parent=85 // pred_check_branch
          %358 = sbr.rel (%p356) target = $region90
        $region89: #{rgcn_forward.1} parent=85 // pred_region
          _
        $region90: #{rgcn_forward.1} parent=85 // pred_fallthru
          _
        %s359 = smul.u32 4, %s19
        %p360 = scmp.lt.s32.totalorder %s359, 7
        %s361 = scalar_select %p360, %s359, 7
        %s362 = smul.addr %s361, 8
        %s363 = scalar_lea.vmem %s0, %s362
        %p364 = pneg %p40
        %p365 = pneg %p37
        %s366 = sand.u32 %s53, 1
        %s367 = sand.u32 %s53, 1
        %s368 = smul.addr %s367, 64
        %s369 = scalar_lea.vmem [#allocation2], %s368
        %p370 = pneg %p66
        %p371 = pneg %p63
        %p372 = scmp.lt.s32.totalorder %s19, 1
        %s373 = scalar_select %p372, %s19, 1
        %s374 = smul.addr %s373, 12
        %s375 = smul.addr %s374, 8
        %s376 = scalar_lea.vmem %s2, %s375
        %p377 = pneg %p92
        %p378 = pneg %p89
        %p379 = pneg %p113
        %p380 = pneg %p110
        %p381 = pneg %p134
        %p382 = pneg %p131
        %p383 = pneg %p155
        %p384 = pneg %p152
        %p385 = pneg %p176
        %p386 = pneg %p173
        %p387 = pneg %p197
        %p388 = pneg %p194
        %p389 = pneg %p223
        %p390 = pneg %p220
        %p391 = scmp.lt.s32.totalorder %s19, 1
        %s392 = scalar_select %p391, %s19, 1
        %s393 = smul.addr %s392, 2
        %s394 = smul.addr %s393, 2
        %s395 = scalar_lea.vmem %s8, %s394
        %s396 = smul.u32 4, %s19
        %p397 = scmp.lt.s32.totalorder %s396, 7
        %s398 = scalar_select %p397, %s396, 7
        %s399 = smul.addr %s398, 8
        %s400 = scalar_lea.vmem %s0, %s399
        %s401 = smul.u32 4, %s19
        %s402 = smul.u32 4, %s19
        %p403 = scmp.lt.s32.totalorder %s19, 1
        %s404 = scalar_select %p403, %s19, 1
        %s405 = smul.addr %s404, 12
        %s406 = smul.addr %s405, 8
        %s407 = scalar_lea.vmem %s2, %s406
        %p408 = scmp.lt.s32.totalorder %s19, 1
        %s409 = scalar_select %p408, %s19, 1
        %s410 = smul.addr %s409, 2
        %s411 = smul.addr %s410, 2
        %s412 = scalar_lea.vmem %s8, %s411
        %v413 = vld [vmem:[%s400] sm:$0xff]
        %v414 = vld [vmem:[%s400 + $0x8] sm:$0xff]
        %v415 = vld [vmem:[%s400 + $0x10] sm:$0xff]
        %v416 = vld [vmem:[%s400 + $0x18] sm:$0xff]
        %v417 = vld [vmem:[%s3] sm:$0xff]
        %v418 = vld [vmem:[%s3 + $0x8] sm:$0xff]
        %v419 = vld [vmem:[%s3 + $0x10] sm:$0xff]
        %v420 = vld [vmem:[%s3 + $0x18] sm:$0xff]
        %v421 = vld [vmem:[%s355] sm:$0xff]
        %v422 = vld [vmem:[%s355 + $0x8] sm:$0xff]
        %v423 = vld [vmem:[%s355 + $0x10] sm:$0xff]
        %v424 = vld [vmem:[%s355 + $0x18] sm:$0xff]
        %v425 = vld [vmem:[%s6] sm:$0xff]
        %v426 = vld [vmem:[%s6 + $0x8] sm:$0xff]
        %v427 = vld [vmem:[%s6 + $0x10] sm:$0xff]
        %v428 = vld [vmem:[%s6 + $0x18] sm:$0xff]
        %v429 = vld [vmem:[%s6 + $0x20] sm:$0xff]
        %v430 = vld [vmem:[%s6 + $0x28] sm:$0xff]
        %v431 = vld [vmem:[%s6 + $0x30] sm:$0xff]
        %v432 = vld [vmem:[%s6 + $0x38] sm:$0xff]
        %v433 = vld [vmem:[%s6 + $0x40] sm:$0xff]
        %v434 = vld [vmem:[%s6 + $0x48] sm:$0xff]
        %v435 = vld [vmem:[%s6 + $0x50] sm:$0xff]
        %v436 = vld [vmem:[%s6 + $0x58] sm:$0xff]
        %v437 = vld [vmem:[%s6 + $0x60] sm:$0xff]
        %v438 = vld [vmem:[%s6 + $0x68] sm:$0xff]
        %v439 = vld [vmem:[%s6 + $0x70] sm:$0xff]
        %v440 = vld [vmem:[%s6 + $0x78] sm:$0xff]
        %vm441 = vcmask 261120
        %v443 = vsel %vm441, %v413, 0
        %v446 = vsel %vm441, %v414, 0
        %v449 = vsel %vm441, %v415, 0
        %v452 = vsel %vm441, %v416, 0
        %454 = vmatprep.subr.mxu0 0.0
        %455 = vmatpush1.msra.mxu0 0.0
        %456 = vmatprep.subr.mxu0 0.0
        %457 = vmatpush1.msra.mxu0 0.0
        %458 = vmatprep.subr.mxu0 0.0
        %459 = vmatpush1.msra.mxu0 0.0
        %460 = vmatprep.subr.mxu0 0.0
        %461 = vmatpush1.msra.mxu0 0.0
        %462 = vmatprep.subr.mxu0 0.0
        %463 = vmatpush1.msra.mxu0 0.0
        %464 = vmatprep.subr.mxu0 0.0
        %465 = vmatpush1.msra.mxu0 0.0
        %466 = vmatprep.subr.mxu0 0.0
        %467 = vmatpush1.msra.mxu0 0.0
        %468 = vmatprep.subr.mxu0 0.0
        %469 = vmatpush1.msra.mxu0 0.0
        %470 = vmatprep.subr.mxu0 0.0
        %471 = vmatpush1.msra.mxu0 0.0
        %472 = vmatprep.subr.mxu0 0.0
        %473 = vmatpush1.msra.mxu0 0.0
        %474 = vmatprep.subr.mxu0 0.0
        %475 = vmatpush1.msra.mxu0 0.0
        %476 = vmatprep.subr.mxu0 0.0
        %477 = vmatpush1.msra.mxu0 0.0
        %478 = vmatprep.subr.mxu0 0.0
        %479 = vmatpush1.msra.mxu0 %v420
        %480 = vmatprep.subr.mxu0 0.0
        %481 = vmatpush1.msra.mxu0 %v419
        %482 = vmatprep.subr.mxu0 0.0
        %483 = vmatpush1.msra.mxu0 %v418
        %484 = vmatprep.subr.mxu0 0.0
        %485 = vmatpush1.msra.mxu0 %v417
        %486 = vmatprep.subr.mxu0 0.0
        %487 = vmatpush2.msra.mxu0 0.0
        %488 = vmatprep.subr.mxu0 0.0
        %489 = vmatpush2.msra.mxu0 0.0
        %490 = vmatprep.subr.mxu0 0.0
        %491 = vmatpush2.msra.mxu0 0.0
        %492 = vmatprep.subr.mxu0 0.0
        %493 = vmatpush2.msra.mxu0 0.0
        %494 = vmatprep.subr.mxu0 0.0
        %495 = vmatpush2.msra.mxu0 0.0
        %496 = vmatprep.subr.mxu0 0.0
        %497 = vmatpush2.msra.mxu0 0.0
        %498 = vmatprep.subr.mxu0 0.0
        %499 = vmatpush2.msra.mxu0 0.0
        %500 = vmatprep.subr.mxu0 0.0
        %501 = vmatpush2.msra.mxu0 0.0
        %502 = vmatprep.subr.mxu0 0.0
        %503 = vmatpush2.msra.mxu0 0.0
        %504 = vmatprep.subr.mxu0 0.0
        %505 = vmatpush2.msra.mxu0 0.0
        %506 = vmatprep.subr.mxu0 0.0
        %507 = vmatpush2.msra.mxu0 0.0
        %508 = vmatprep.subr.mxu0 0.0
        %509 = vmatpush2.msra.mxu0 0.0
        %510 = vmatprep.subr.mxu0 0.0
        %511 = vmatpush2.msra.mxu0 0.0
        %512 = vmatprep.subr.mxu0 0.0
        %513 = vmatpush2.msra.mxu0 0.0
        %514 = vmatprep.subr.mxu0 0.0
        %515 = vmatpush2.msra.mxu0 0.0
        %516 = vmatprep.subr.mxu0 0.0
        %517 = vmatpush2.msra.mxu0 0.0
        %518 = vmatprep.mubr.f32.mxu0 0.0
        %519 = vmatmul.mubr.f32.gmra.mxu0 %v443
        %v520 = vpop.f32.mrf.mxu0
        %v521 = vadd.f32 %v421, %v520
        %v522 = vpop.f32.mrf.mxu0
        %523 = vmatprep.mubr.f32.mxu0 0.0
        %524 = vmatmul.mubr.f32.gmra.mxu0 %v446
        %v525 = vpop.f32.mrf.mxu0
        %v526 = vadd.f32 %v422, %v525
        %v527 = vpop.f32.mrf.mxu0
        %528 = vmatprep.mubr.f32.mxu0 0.0
        %529 = vmatmul.mubr.f32.gmra.mxu0 %v449
        %v530 = vpop.f32.mrf.mxu0
        %v531 = vadd.f32 %v423, %v530
        %v532 = vpop.f32.mrf.mxu0
        %533 = vmatprep.mubr.f32.mxu0 0.0
        %534 = vmatmul.mubr.f32.gmra.mxu0 %v452
        %v535 = vpop.f32.mrf.mxu0
        %v536 = vadd.f32 %v424, %v535
        %v537 = vpop.f32.mrf.mxu0
        %538 = vdwg.mxu0
        %v539 = vsel %vm441, %v521, 0.0
        %540 = vadd.xlane.f32.xlu0 %v539
        %v541 = vpop.xlane.xlu0 %540
        %v542 = vsel %vm441, %v526, 0.0
        %543 = vadd.xlane.f32.xlu0 %v542
        %v544 = vpop.xlane.xlu0 %543
        %v545 = vsel %vm441, %v531, 0.0
        %546 = vadd.xlane.f32.xlu0 %v545
        %v547 = vpop.xlane.xlu0 %546
        %v548 = vsel %vm441, %v536, 0.0
        %549 = vadd.xlane.f32.xlu0 %v548
        %v550 = vpop.xlane.xlu0 %549
        %v551 = vrcp.pop 32.0
        %v552 = vmul.f32 %v541, %v551
        %v553 = vmul.f32 %v544, %v551
        %v554 = vmul.f32 %v547, %v551
        %v555 = vmul.f32 %v550, %v551
        %v556 = vsub.f32 %v521, %v552
        %v557 = vsub.f32 %v526, %v553
        %v558 = vsub.f32 %v531, %v554
        %v559 = vsub.f32 %v536, %v555
        %v560 = vmul.f32 %v556, %v556
        %v561 = vmul.f32 %v557, %v557
        %v562 = vmul.f32 %v558, %v558
        %v563 = vmul.f32 %v559, %v559
        %v564 = vsel %vm441, %v560, 0.0
        %565 = vadd.xlane.f32.xlu0 %v564
        %v566 = vpop.xlane.xlu0 %565
        %v567 = vsel %vm441, %v561, 0.0
        %568 = vadd.xlane.f32.xlu0 %v567
        %v569 = vpop.xlane.xlu0 %568
        %v570 = vsel %vm441, %v562, 0.0
        %571 = vadd.xlane.f32.xlu0 %v570
        %v572 = vpop.xlane.xlu0 %571
        %v573 = vsel %vm441, %v563, 0.0
        %574 = vadd.xlane.f32.xlu0 %v573
        %v575 = vpop.xlane.xlu0 %574
        %v576 = vmul.f32 %v566, %v551
        %v577 = vmul.f32 %v569, %v551
        %v578 = vmul.f32 %v572, %v551
        %v579 = vmul.f32 %v575, %v551
        %v580 = vadd.f32 %v576, 1e-05
        %v581 = vadd.f32 %v577, 1e-05
        %v582 = vadd.f32 %v578, 1e-05
        %v583 = vadd.f32 %v579, 1e-05
        %v584 = vrsqrt.pop %v580
        %v585 = vrsqrt.pop %v581
        %v586 = vrsqrt.pop %v582
        %v587 = vrsqrt.pop %v583
        %v588 = vmul.f32 %v556, %v584
        %v589 = vmul.f32 %v557, %v585
        %v590 = vmul.f32 %v558, %v586
        %v591 = vmul.f32 %v559, %v587
        %v592 = vld [vmem:[%s4] sm:$0x1]
        %v594 = vlaneseq
        %v595 = vshrl.u32 %v594, 7
        %v596 = vsub.s32 0, %v595
        %v597 = vrot.slane %v592, %v596
        %v599 = vmul.f32 %v588, %v597
        %v600 = vmul.f32 %v589, %v597
        %v601 = vmul.f32 %v590, %v597
        %v602 = vmul.f32 %v591, %v597
        %v603 = vld [vmem:[%s5] sm:$0x1]
        %v605 = vlaneseq
        %v606 = vshrl.u32 %v605, 7
        %v607 = vsub.s32 0, %v606
        %v608 = vrot.slane %v603, %v607
        %v610 = vadd.f32 %v599, %v608
        %v611 = vadd.f32 %v600, %v608
        %v612 = vadd.f32 %v601, %v608
        %v613 = vadd.f32 %v602, %v608
        %v614 = vtanh.pop %v610
        %v615 = vtanh.pop %v611
        %v616 = vtanh.pop %v612
        %v617 = vtanh.pop %v613
        %v618 = vld [vmem:[%s407] sm:$0xff]
        %v619 = vld [vmem:[%s407 + $0x8] sm:$0xff]
        %v620 = vld [vmem:[%s407 + $0x10] sm:$0xff]
        %v621 = vld [vmem:[%s407 + $0x18] sm:$0xff]
        %v623 = vsel %vm441, %v618, 0
        %v626 = vsel %vm441, %v619, 0
        %v629 = vsel %vm441, %v620, 0
        %v632 = vsel %vm441, %v621, 0
        %634 = vmatprep.subr.mxu0 0.0
        %635 = vmatpush1.msra.mxu0 0.0
        %636 = vmatprep.subr.mxu0 0.0
        %637 = vmatpush1.msra.mxu0 0.0
        %638 = vmatprep.subr.mxu0 0.0
        %639 = vmatpush1.msra.mxu0 0.0
        %640 = vmatprep.subr.mxu0 0.0
        %641 = vmatpush1.msra.mxu0 0.0
        %642 = vmatprep.subr.mxu0 0.0
        %643 = vmatpush1.msra.mxu0 0.0
        %644 = vmatprep.subr.mxu0 0.0
        %645 = vmatpush1.msra.mxu0 0.0
        %646 = vmatprep.subr.mxu0 0.0
        %647 = vmatpush1.msra.mxu0 0.0
        %648 = vmatprep.subr.mxu0 0.0
        %649 = vmatpush1.msra.mxu0 0.0
        %650 = vmatprep.subr.mxu0 0.0
        %651 = vmatpush1.msra.mxu0 0.0
        %652 = vmatprep.subr.mxu0 0.0
        %653 = vmatpush1.msra.mxu0 0.0
        %654 = vmatprep.subr.mxu0 0.0
        %655 = vmatpush1.msra.mxu0 0.0
        %656 = vmatprep.subr.mxu0 0.0
        %657 = vmatpush1.msra.mxu0 0.0
        %658 = vmatprep.subr.mxu0 0.0
        %659 = vmatpush1.msra.mxu0 %v617
        %660 = vmatprep.subr.mxu0 0.0
        %661 = vmatpush1.msra.mxu0 %v616
        %662 = vmatprep.subr.mxu0 0.0
        %663 = vmatpush1.msra.mxu0 %v615
        %664 = vmatprep.subr.mxu0 0.0
        %665 = vmatpush1.msra.mxu0 %v614
        %666 = vmatprep.subr.mxu0 0.0
        %667 = vmatpush2.msra.mxu0 0.0
        %668 = vmatprep.subr.mxu0 0.0
        %669 = vmatpush2.msra.mxu0 0.0
        %670 = vmatprep.subr.mxu0 0.0
        %671 = vmatpush2.msra.mxu0 0.0
        %672 = vmatprep.subr.mxu0 0.0
        %673 = vmatpush2.msra.mxu0 0.0
        %674 = vmatprep.subr.mxu0 0.0
        %675 = vmatpush2.msra.mxu0 0.0
        %676 = vmatprep.subr.mxu0 0.0
        %677 = vmatpush2.msra.mxu0 0.0
        %678 = vmatprep.subr.mxu0 0.0
        %679 = vmatpush2.msra.mxu0 0.0
        %680 = vmatprep.subr.mxu0 0.0
        %681 = vmatpush2.msra.mxu0 0.0
        %682 = vmatprep.subr.mxu0 0.0
        %683 = vmatpush2.msra.mxu0 0.0
        %684 = vmatprep.subr.mxu0 0.0
        %685 = vmatpush2.msra.mxu0 0.0
        %686 = vmatprep.subr.mxu0 0.0
        %687 = vmatpush2.msra.mxu0 0.0
        %688 = vmatprep.subr.mxu0 0.0
        %689 = vmatpush2.msra.mxu0 0.0
        %690 = vmatprep.subr.mxu0 0.0
        %691 = vmatpush2.msra.mxu0 0.0
        %692 = vmatprep.subr.mxu0 0.0
        %693 = vmatpush2.msra.mxu0 0.0
        %694 = vmatprep.subr.mxu0 0.0
        %695 = vmatpush2.msra.mxu0 0.0
        %696 = vmatprep.subr.mxu0 0.0
        %697 = vmatpush2.msra.mxu0 0.0
        %698 = vmatprep.mubr.f32.mxu0 0.0
        %699 = vmatmul.mubr.f32.gmra.mxu0 %v623
        %v700 = vpop.f32.mrf.mxu0
        %v701 = vadd.f32 0.0, %v700
        %v702 = vpop.f32.mrf.mxu0
        %703 = vmatprep.mubr.f32.mxu0 0.0
        %704 = vmatmul.mubr.f32.gmra.mxu0 %v626
        %v705 = vpop.f32.mrf.mxu0
        %v706 = vadd.f32 0.0, %v705
        %v707 = vpop.f32.mrf.mxu0
        %708 = vmatprep.mubr.f32.mxu0 0.0
        %709 = vmatmul.mubr.f32.gmra.mxu0 %v629
        %v710 = vpop.f32.mrf.mxu0
        %v711 = vadd.f32 0.0, %v710
        %v712 = vpop.f32.mrf.mxu0
        %713 = vmatprep.mubr.f32.mxu0 0.0
        %714 = vmatmul.mubr.f32.gmra.mxu0 %v632
        %v715 = vpop.f32.mrf.mxu0
        %v716 = vadd.f32 0.0, %v715
        %v717 = vpop.f32.mrf.mxu0
        %718 = vdwg.mxu0
        %v720 = vsel %vm441, %v701, 0
        %v723 = vsel %vm441, %v706, 0
        %v726 = vsel %vm441, %v711, 0
        %v729 = vsel %vm441, %v716, 0
        %731 = vmatprep.subr.mxu0 0.0
        %732 = vmatpush1.msra.mxu0 0.0
        %733 = vmatprep.subr.mxu0 0.0
        %734 = vmatpush1.msra.mxu0 0.0
        %735 = vmatprep.subr.mxu0 0.0
        %736 = vmatpush1.msra.mxu0 0.0
        %737 = vmatprep.subr.mxu0 0.0
        %738 = vmatpush1.msra.mxu0 0.0
        %739 = vmatprep.subr.mxu0 0.0
        %740 = vmatpush1.msra.mxu0 0.0
        %741 = vmatprep.subr.mxu0 0.0
        %742 = vmatpush1.msra.mxu0 0.0
        %743 = vmatprep.subr.mxu0 0.0
        %744 = vmatpush1.msra.mxu0 0.0
        %745 = vmatprep.subr.mxu0 0.0
        %746 = vmatpush1.msra.mxu0 0.0
        %747 = vmatprep.subr.mxu0 0.0
        %748 = vmatpush1.msra.mxu0 0.0
        %749 = vmatprep.subr.mxu0 0.0
        %750 = vmatpush1.msra.mxu0 0.0
        %751 = vmatprep.subr.mxu0 0.0
        %752 = vmatpush1.msra.mxu0 0.0
        %753 = vmatprep.subr.mxu0 0.0
        %754 = vmatpush1.msra.mxu0 0.0
        %755 = vmatprep.subr.mxu0 0.0
        %756 = vmatpush1.msra.mxu0 %v432
        %757 = vmatprep.subr.mxu0 0.0
        %758 = vmatpush1.msra.mxu0 %v431
        %759 = vmatprep.subr.mxu0 0.0
        %760 = vmatpush1.msra.mxu0 %v430
        %761 = vmatprep.subr.mxu0 0.0
        %762 = vmatpush1.msra.mxu0 %v429
        %763 = vmatprep.subr.mxu0 0.0
        %764 = vmatpush2.msra.mxu0 0.0
        %765 = vmatprep.subr.mxu0 0.0
        %766 = vmatpush2.msra.mxu0 0.0
        %767 = vmatprep.subr.mxu0 0.0
        %768 = vmatpush2.msra.mxu0 0.0
        %769 = vmatprep.subr.mxu0 0.0
        %770 = vmatpush2.msra.mxu0 0.0
        %771 = vmatprep.subr.mxu0 0.0
        %772 = vmatpush2.msra.mxu0 0.0
        %773 = vmatprep.subr.mxu0 0.0
        %774 = vmatpush2.msra.mxu0 0.0
        %775 = vmatprep.subr.mxu0 0.0
        %776 = vmatpush2.msra.mxu0 0.0
        %777 = vmatprep.subr.mxu0 0.0
        %778 = vmatpush2.msra.mxu0 0.0
        %779 = vmatprep.subr.mxu0 0.0
        %780 = vmatpush2.msra.mxu0 0.0
        %781 = vmatprep.subr.mxu0 0.0
        %782 = vmatpush2.msra.mxu0 0.0
        %783 = vmatprep.subr.mxu0 0.0
        %784 = vmatpush2.msra.mxu0 0.0
        %785 = vmatprep.subr.mxu0 0.0
        %786 = vmatpush2.msra.mxu0 0.0
        %787 = vmatprep.subr.mxu0 0.0
        %788 = vmatpush2.msra.mxu0 0.0
        %789 = vmatprep.subr.mxu0 0.0
        %790 = vmatpush2.msra.mxu0 0.0
        %791 = vmatprep.subr.mxu0 0.0
        %792 = vmatpush2.msra.mxu0 0.0
        %793 = vmatprep.subr.mxu0 0.0
        %794 = vmatpush2.msra.mxu0 0.0
        %795 = vmatprep.mubr.f32.mxu0 0.0
        %796 = vmatmul.mubr.f32.gmra.mxu0 %v720
        %v797 = vpop.f32.mrf.mxu0
        %v798 = vadd.f32 0.0, %v797
        %v799 = vpop.f32.mrf.mxu0
        %800 = vmatprep.mubr.f32.mxu0 0.0
        %801 = vmatmul.mubr.f32.gmra.mxu0 %v723
        %v802 = vpop.f32.mrf.mxu0
        %v803 = vadd.f32 0.0, %v802
        %v804 = vpop.f32.mrf.mxu0
        %805 = vmatprep.mubr.f32.mxu0 0.0
        %806 = vmatmul.mubr.f32.gmra.mxu0 %v726
        %v807 = vpop.f32.mrf.mxu0
        %v808 = vadd.f32 0.0, %v807
        %v809 = vpop.f32.mrf.mxu0
        %810 = vmatprep.mubr.f32.mxu0 0.0
        %811 = vmatmul.mubr.f32.gmra.mxu0 %v729
        %v812 = vpop.f32.mrf.mxu0
        %v813 = vadd.f32 0.0, %v812
        %v814 = vpop.f32.mrf.mxu0
        %815 = vdwg.mxu0
        %v817 = vsel %vm441, %v614, 0
        %v820 = vsel %vm441, %v615, 0
        %v823 = vsel %vm441, %v616, 0
        %v826 = vsel %vm441, %v617, 0
        %828 = vmatprep.subr.mxu0 0.0
        %829 = vmatpush1.msra.mxu0 0.0
        %830 = vmatprep.subr.mxu0 0.0
        %831 = vmatpush1.msra.mxu0 0.0
        %832 = vmatprep.subr.mxu0 0.0
        %833 = vmatpush1.msra.mxu0 0.0
        %834 = vmatprep.subr.mxu0 0.0
        %835 = vmatpush1.msra.mxu0 0.0
        %836 = vmatprep.subr.mxu0 0.0
        %837 = vmatpush1.msra.mxu0 0.0
        %838 = vmatprep.subr.mxu0 0.0
        %839 = vmatpush1.msra.mxu0 0.0
        %840 = vmatprep.subr.mxu0 0.0
        %841 = vmatpush1.msra.mxu0 0.0
        %842 = vmatprep.subr.mxu0 0.0
        %843 = vmatpush1.msra.mxu0 0.0
        %844 = vmatprep.subr.mxu0 0.0
        %845 = vmatpush1.msra.mxu0 0.0
        %846 = vmatprep.subr.mxu0 0.0
        %847 = vmatpush1.msra.mxu0 0.0
        %848 = vmatprep.subr.mxu0 0.0
        %849 = vmatpush1.msra.mxu0 0.0
        %850 = vmatprep.subr.mxu0 0.0
        %851 = vmatpush1.msra.mxu0 0.0
        %852 = vmatprep.subr.mxu0 0.0
        %853 = vmatpush1.msra.mxu0 %v428
        %854 = vmatprep.subr.mxu0 0.0
        %855 = vmatpush1.msra.mxu0 %v427
        %856 = vmatprep.subr.mxu0 0.0
        %857 = vmatpush1.msra.mxu0 %v426
        %858 = vmatprep.subr.mxu0 0.0
        %859 = vmatpush1.msra.mxu0 %v425
        %860 = vmatprep.subr.mxu0 0.0
        %861 = vmatpush2.msra.mxu0 0.0
        %862 = vmatprep.subr.mxu0 0.0
        %863 = vmatpush2.msra.mxu0 0.0
        %864 = vmatprep.subr.mxu0 0.0
        %865 = vmatpush2.msra.mxu0 0.0
        %866 = vmatprep.subr.mxu0 0.0
        %867 = vmatpush2.msra.mxu0 0.0
        %868 = vmatprep.subr.mxu0 0.0
        %869 = vmatpush2.msra.mxu0 0.0
        %870 = vmatprep.subr.mxu0 0.0
        %871 = vmatpush2.msra.mxu0 0.0
        %872 = vmatprep.subr.mxu0 0.0
        %873 = vmatpush2.msra.mxu0 0.0
        %874 = vmatprep.subr.mxu0 0.0
        %875 = vmatpush2.msra.mxu0 0.0
        %876 = vmatprep.subr.mxu0 0.0
        %877 = vmatpush2.msra.mxu0 0.0
        %878 = vmatprep.subr.mxu0 0.0
        %879 = vmatpush2.msra.mxu0 0.0
        %880 = vmatprep.subr.mxu0 0.0
        %881 = vmatpush2.msra.mxu0 0.0
        %882 = vmatprep.subr.mxu0 0.0
        %883 = vmatpush2.msra.mxu0 0.0
        %884 = vmatprep.subr.mxu0 0.0
        %885 = vmatpush2.msra.mxu0 0.0
        %886 = vmatprep.subr.mxu0 0.0
        %887 = vmatpush2.msra.mxu0 0.0
        %888 = vmatprep.subr.mxu0 0.0
        %889 = vmatpush2.msra.mxu0 0.0
        %890 = vmatprep.subr.mxu0 0.0
        %891 = vmatpush2.msra.mxu0 0.0
        %892 = vmatprep.mubr.f32.mxu0 0.0
        %893 = vmatmul.mubr.f32.gmra.mxu0 %v817
        %v894 = vpop.f32.mrf.mxu0
        %v895 = vadd.f32 %v798, %v894
        %v896 = vpop.f32.mrf.mxu0
        %897 = vmatprep.mubr.f32.mxu0 0.0
        %898 = vmatmul.mubr.f32.gmra.mxu0 %v820
        %v899 = vpop.f32.mrf.mxu0
        %v900 = vadd.f32 %v803, %v899
        %v901 = vpop.f32.mrf.mxu0
        %902 = vmatprep.mubr.f32.mxu0 0.0
        %903 = vmatmul.mubr.f32.gmra.mxu0 %v823
        %v904 = vpop.f32.mrf.mxu0
        %v905 = vadd.f32 %v808, %v904
        %v906 = vpop.f32.mrf.mxu0
        %907 = vmatprep.mubr.f32.mxu0 0.0
        %908 = vmatmul.mubr.f32.gmra.mxu0 %v826
        %v909 = vpop.f32.mrf.mxu0
        %v910 = vadd.f32 %v813, %v909
        %v911 = vpop.f32.mrf.mxu0
        %912 = vdwg.mxu0
        %s913 = scalar_lea.vmem %s407, 32
        %v914 = vld [vmem:[%s913] sm:$0xff]
        %v915 = vld [vmem:[%s913 + $0x8] sm:$0xff]
        %v916 = vld [vmem:[%s913 + $0x10] sm:$0xff]
        %v917 = vld [vmem:[%s913 + $0x18] sm:$0xff]
        %v919 = vsel %vm441, %v914, 0
        %v922 = vsel %vm441, %v915, 0
        %v925 = vsel %vm441, %v916, 0
        %v928 = vsel %vm441, %v917, 0
        %930 = vmatprep.subr.mxu0 0.0
        %931 = vmatpush1.msra.mxu0 0.0
        %932 = vmatprep.subr.mxu0 0.0
        %933 = vmatpush1.msra.mxu0 0.0
        %934 = vmatprep.subr.mxu0 0.0
        %935 = vmatpush1.msra.mxu0 0.0
        %936 = vmatprep.subr.mxu0 0.0
        %937 = vmatpush1.msra.mxu0 0.0
        %938 = vmatprep.subr.mxu0 0.0
        %939 = vmatpush1.msra.mxu0 0.0
        %940 = vmatprep.subr.mxu0 0.0
        %941 = vmatpush1.msra.mxu0 0.0
        %942 = vmatprep.subr.mxu0 0.0
        %943 = vmatpush1.msra.mxu0 0.0
        %944 = vmatprep.subr.mxu0 0.0
        %945 = vmatpush1.msra.mxu0 0.0
        %946 = vmatprep.subr.mxu0 0.0
        %947 = vmatpush1.msra.mxu0 0.0
        %948 = vmatprep.subr.mxu0 0.0
        %949 = vmatpush1.msra.mxu0 0.0
        %950 = vmatprep.subr.mxu0 0.0
        %951 = vmatpush1.msra.mxu0 0.0
        %952 = vmatprep.subr.mxu0 0.0
        %953 = vmatpush1.msra.mxu0 0.0
        %954 = vmatprep.subr.mxu0 0.0
        %955 = vmatpush1.msra.mxu0 %v617
        %956 = vmatprep.subr.mxu0 0.0
        %957 = vmatpush1.msra.mxu0 %v616
        %958 = vmatprep.subr.mxu0 0.0
        %959 = vmatpush1.msra.mxu0 %v615
        %960 = vmatprep.subr.mxu0 0.0
        %961 = vmatpush1.msra.mxu0 %v614
        %962 = vmatprep.subr.mxu0 0.0
        %963 = vmatpush2.msra.mxu0 0.0
        %964 = vmatprep.subr.mxu0 0.0
        %965 = vmatpush2.msra.mxu0 0.0
        %966 = vmatprep.subr.mxu0 0.0
        %967 = vmatpush2.msra.mxu0 0.0
        %968 = vmatprep.subr.mxu0 0.0
        %969 = vmatpush2.msra.mxu0 0.0
        %970 = vmatprep.subr.mxu0 0.0
        %971 = vmatpush2.msra.mxu0 0.0
        %972 = vmatprep.subr.mxu0 0.0
        %973 = vmatpush2.msra.mxu0 0.0
        %974 = vmatprep.subr.mxu0 0.0
        %975 = vmatpush2.msra.mxu0 0.0
        %976 = vmatprep.subr.mxu0 0.0
        %977 = vmatpush2.msra.mxu0 0.0
        %978 = vmatprep.subr.mxu0 0.0
        %979 = vmatpush2.msra.mxu0 0.0
        %980 = vmatprep.subr.mxu0 0.0
        %981 = vmatpush2.msra.mxu0 0.0
        %982 = vmatprep.subr.mxu0 0.0
        %983 = vmatpush2.msra.mxu0 0.0
        %984 = vmatprep.subr.mxu0 0.0
        %985 = vmatpush2.msra.mxu0 0.0
        %986 = vmatprep.subr.mxu0 0.0
        %987 = vmatpush2.msra.mxu0 0.0
        %988 = vmatprep.subr.mxu0 0.0
        %989 = vmatpush2.msra.mxu0 0.0
        %990 = vmatprep.subr.mxu0 0.0
        %991 = vmatpush2.msra.mxu0 0.0
        %992 = vmatprep.subr.mxu0 0.0
        %993 = vmatpush2.msra.mxu0 0.0
        %994 = vmatprep.mubr.f32.mxu0 0.0
        %995 = vmatmul.mubr.f32.gmra.mxu0 %v919
        %v996 = vpop.f32.mrf.mxu0
        %v997 = vadd.f32 0.0, %v996
        %v998 = vpop.f32.mrf.mxu0
        %999 = vmatprep.mubr.f32.mxu0 0.0
        %1000 = vmatmul.mubr.f32.gmra.mxu0 %v922
        %v1001 = vpop.f32.mrf.mxu0
        %v1002 = vadd.f32 0.0, %v1001
        %v1003 = vpop.f32.mrf.mxu0
        %1004 = vmatprep.mubr.f32.mxu0 0.0
        %1005 = vmatmul.mubr.f32.gmra.mxu0 %v925
        %v1006 = vpop.f32.mrf.mxu0
        %v1007 = vadd.f32 0.0, %v1006
        %v1008 = vpop.f32.mrf.mxu0
        %1009 = vmatprep.mubr.f32.mxu0 0.0
        %1010 = vmatmul.mubr.f32.gmra.mxu0 %v928
        %v1011 = vpop.f32.mrf.mxu0
        %v1012 = vadd.f32 0.0, %v1011
        %v1013 = vpop.f32.mrf.mxu0
        %1014 = vdwg.mxu0
        %v1016 = vsel %vm441, %v997, 0
        %v1019 = vsel %vm441, %v1002, 0
        %v1022 = vsel %vm441, %v1007, 0
        %v1025 = vsel %vm441, %v1012, 0
        %1027 = vmatprep.subr.mxu0 0.0
        %1028 = vmatpush1.msra.mxu0 0.0
        %1029 = vmatprep.subr.mxu0 0.0
        %1030 = vmatpush1.msra.mxu0 0.0
        %1031 = vmatprep.subr.mxu0 0.0
        %1032 = vmatpush1.msra.mxu0 0.0
        %1033 = vmatprep.subr.mxu0 0.0
        %1034 = vmatpush1.msra.mxu0 0.0
        %1035 = vmatprep.subr.mxu0 0.0
        %1036 = vmatpush1.msra.mxu0 0.0
        %1037 = vmatprep.subr.mxu0 0.0
        %1038 = vmatpush1.msra.mxu0 0.0
        %1039 = vmatprep.subr.mxu0 0.0
        %1040 = vmatpush1.msra.mxu0 0.0
        %1041 = vmatprep.subr.mxu0 0.0
        %1042 = vmatpush1.msra.mxu0 0.0
        %1043 = vmatprep.subr.mxu0 0.0
        %1044 = vmatpush1.msra.mxu0 0.0
        %1045 = vmatprep.subr.mxu0 0.0
        %1046 = vmatpush1.msra.mxu0 0.0
        %1047 = vmatprep.subr.mxu0 0.0
        %1048 = vmatpush1.msra.mxu0 0.0
        %1049 = vmatprep.subr.mxu0 0.0
        %1050 = vmatpush1.msra.mxu0 0.0
        %1051 = vmatprep.subr.mxu0 0.0
        %1052 = vmatpush1.msra.mxu0 %v436
        %1053 = vmatprep.subr.mxu0 0.0
        %1054 = vmatpush1.msra.mxu0 %v435
        %1055 = vmatprep.subr.mxu0 0.0
        %1056 = vmatpush1.msra.mxu0 %v434
        %1057 = vmatprep.subr.mxu0 0.0
        %1058 = vmatpush1.msra.mxu0 %v433
        %1059 = vmatprep.subr.mxu0 0.0
        %1060 = vmatpush2.msra.mxu0 0.0
        %1061 = vmatprep.subr.mxu0 0.0
        %1062 = vmatpush2.msra.mxu0 0.0
        %1063 = vmatprep.subr.mxu0 0.0
        %1064 = vmatpush2.msra.mxu0 0.0
        %1065 = vmatprep.subr.mxu0 0.0
        %1066 = vmatpush2.msra.mxu0 0.0
        %1067 = vmatprep.subr.mxu0 0.0
        %1068 = vmatpush2.msra.mxu0 0.0
        %1069 = vmatprep.subr.mxu0 0.0
        %1070 = vmatpush2.msra.mxu0 0.0
        %1071 = vmatprep.subr.mxu0 0.0
        %1072 = vmatpush2.msra.mxu0 0.0
        %1073 = vmatprep.subr.mxu0 0.0
        %1074 = vmatpush2.msra.mxu0 0.0
        %1075 = vmatprep.subr.mxu0 0.0
        %1076 = vmatpush2.msra.mxu0 0.0
        %1077 = vmatprep.subr.mxu0 0.0
        %1078 = vmatpush2.msra.mxu0 0.0
        %1079 = vmatprep.subr.mxu0 0.0
        %1080 = vmatpush2.msra.mxu0 0.0
        %1081 = vmatprep.subr.mxu0 0.0
        %1082 = vmatpush2.msra.mxu0 0.0
        %1083 = vmatprep.subr.mxu0 0.0
        %1084 = vmatpush2.msra.mxu0 0.0
        %1085 = vmatprep.subr.mxu0 0.0
        %1086 = vmatpush2.msra.mxu0 0.0
        %1087 = vmatprep.subr.mxu0 0.0
        %1088 = vmatpush2.msra.mxu0 0.0
        %1089 = vmatprep.subr.mxu0 0.0
        %1090 = vmatpush2.msra.mxu0 0.0
        %1091 = vmatprep.mubr.f32.mxu0 0.0
        %1092 = vmatmul.mubr.f32.gmra.mxu0 %v1016
        %v1093 = vpop.f32.mrf.mxu0
        %v1094 = vadd.f32 0.0, %v1093
        %v1095 = vpop.f32.mrf.mxu0
        %1096 = vmatprep.mubr.f32.mxu0 0.0
        %1097 = vmatmul.mubr.f32.gmra.mxu0 %v1019
        %v1098 = vpop.f32.mrf.mxu0
        %v1099 = vadd.f32 0.0, %v1098
        %v1100 = vpop.f32.mrf.mxu0
        %1101 = vmatprep.mubr.f32.mxu0 0.0
        %1102 = vmatmul.mubr.f32.gmra.mxu0 %v1022
        %v1103 = vpop.f32.mrf.mxu0
        %v1104 = vadd.f32 0.0, %v1103
        %v1105 = vpop.f32.mrf.mxu0
        %1106 = vmatprep.mubr.f32.mxu0 0.0
        %1107 = vmatmul.mubr.f32.gmra.mxu0 %v1025
        %v1108 = vpop.f32.mrf.mxu0
        %v1109 = vadd.f32 0.0, %v1108
        %v1110 = vpop.f32.mrf.mxu0
        %1111 = vdwg.mxu0
        %v1112 = vadd.f32 %v895, %v1094
        %v1113 = vadd.f32 %v900, %v1099
        %v1114 = vadd.f32 %v905, %v1104
        %v1115 = vadd.f32 %v910, %v1109
        %s1116 = scalar_lea.vmem %s407, 64
        %v1117 = vld [vmem:[%s1116] sm:$0xff]
        %v1118 = vld [vmem:[%s1116 + $0x8] sm:$0xff]
        %v1119 = vld [vmem:[%s1116 + $0x10] sm:$0xff]
        %v1120 = vld [vmem:[%s1116 + $0x18] sm:$0xff]
        %v1122 = vsel %vm441, %v1117, 0
        %v1125 = vsel %vm441, %v1118, 0
        %v1128 = vsel %vm441, %v1119, 0
        %v1131 = vsel %vm441, %v1120, 0
        %1133 = vmatprep.subr.mxu0 0.0
        %1134 = vmatpush1.msra.mxu0 0.0
        %1135 = vmatprep.subr.mxu0 0.0
        %1136 = vmatpush1.msra.mxu0 0.0
        %1137 = vmatprep.subr.mxu0 0.0
        %1138 = vmatpush1.msra.mxu0 0.0
        %1139 = vmatprep.subr.mxu0 0.0
        %1140 = vmatpush1.msra.mxu0 0.0
        %1141 = vmatprep.subr.mxu0 0.0
        %1142 = vmatpush1.msra.mxu0 0.0
        %1143 = vmatprep.subr.mxu0 0.0
        %1144 = vmatpush1.msra.mxu0 0.0
        %1145 = vmatprep.subr.mxu0 0.0
        %1146 = vmatpush1.msra.mxu0 0.0
        %1147 = vmatprep.subr.mxu0 0.0
        %1148 = vmatpush1.msra.mxu0 0.0
        %1149 = vmatprep.subr.mxu0 0.0
        %1150 = vmatpush1.msra.mxu0 0.0
        %1151 = vmatprep.subr.mxu0 0.0
        %1152 = vmatpush1.msra.mxu0 0.0
        %1153 = vmatprep.subr.mxu0 0.0
        %1154 = vmatpush1.msra.mxu0 0.0
        %1155 = vmatprep.subr.mxu0 0.0
        %1156 = vmatpush1.msra.mxu0 0.0
        %1157 = vmatprep.subr.mxu0 0.0
        %1158 = vmatpush1.msra.mxu0 %v617
        %1159 = vmatprep.subr.mxu0 0.0
        %1160 = vmatpush1.msra.mxu0 %v616
        %1161 = vmatprep.subr.mxu0 0.0
        %1162 = vmatpush1.msra.mxu0 %v615
        %1163 = vmatprep.subr.mxu0 0.0
        %1164 = vmatpush1.msra.mxu0 %v614
        %1165 = vmatprep.subr.mxu0 0.0
        %1166 = vmatpush2.msra.mxu0 0.0
        %1167 = vmatprep.subr.mxu0 0.0
        %1168 = vmatpush2.msra.mxu0 0.0
        %1169 = vmatprep.subr.mxu0 0.0
        %1170 = vmatpush2.msra.mxu0 0.0
        %1171 = vmatprep.subr.mxu0 0.0
        %1172 = vmatpush2.msra.mxu0 0.0
        %1173 = vmatprep.subr.mxu0 0.0
        %1174 = vmatpush2.msra.mxu0 0.0
        %1175 = vmatprep.subr.mxu0 0.0
        %1176 = vmatpush2.msra.mxu0 0.0
        %1177 = vmatprep.subr.mxu0 0.0
        %1178 = vmatpush2.msra.mxu0 0.0
        %1179 = vmatprep.subr.mxu0 0.0
        %1180 = vmatpush2.msra.mxu0 0.0
        %1181 = vmatprep.subr.mxu0 0.0
        %1182 = vmatpush2.msra.mxu0 0.0
        %1183 = vmatprep.subr.mxu0 0.0
        %1184 = vmatpush2.msra.mxu0 0.0
        %1185 = vmatprep.subr.mxu0 0.0
        %1186 = vmatpush2.msra.mxu0 0.0
        %1187 = vmatprep.subr.mxu0 0.0
        %1188 = vmatpush2.msra.mxu0 0.0
        %1189 = vmatprep.subr.mxu0 0.0
        %1190 = vmatpush2.msra.mxu0 0.0
        %1191 = vmatprep.subr.mxu0 0.0
        %1192 = vmatpush2.msra.mxu0 0.0
        %1193 = vmatprep.subr.mxu0 0.0
        %1194 = vmatpush2.msra.mxu0 0.0
        %1195 = vmatprep.subr.mxu0 0.0
        %1196 = vmatpush2.msra.mxu0 0.0
        %1197 = vmatprep.mubr.f32.mxu0 0.0
        %1198 = vmatmul.mubr.f32.gmra.mxu0 %v1122
        %v1199 = vpop.f32.mrf.mxu0
        %v1200 = vadd.f32 0.0, %v1199
        %v1201 = vpop.f32.mrf.mxu0
        %1202 = vmatprep.mubr.f32.mxu0 0.0
        %1203 = vmatmul.mubr.f32.gmra.mxu0 %v1125
        %v1204 = vpop.f32.mrf.mxu0
        %v1205 = vadd.f32 0.0, %v1204
        %v1206 = vpop.f32.mrf.mxu0
        %1207 = vmatprep.mubr.f32.mxu0 0.0
        %1208 = vmatmul.mubr.f32.gmra.mxu0 %v1128
        %v1209 = vpop.f32.mrf.mxu0
        %v1210 = vadd.f32 0.0, %v1209
        %v1211 = vpop.f32.mrf.mxu0
        %1212 = vmatprep.mubr.f32.mxu0 0.0
        %1213 = vmatmul.mubr.f32.gmra.mxu0 %v1131
        %v1214 = vpop.f32.mrf.mxu0
        %v1215 = vadd.f32 0.0, %v1214
        %v1216 = vpop.f32.mrf.mxu0
        %1217 = vdwg.mxu0
        %v1219 = vsel %vm441, %v1200, 0
        %v1222 = vsel %vm441, %v1205, 0
        %v1225 = vsel %vm441, %v1210, 0
        %v1228 = vsel %vm441, %v1215, 0
        %1230 = vmatprep.subr.mxu0 0.0
        %1231 = vmatpush1.msra.mxu0 0.0
        %1232 = vmatprep.subr.mxu0 0.0
        %1233 = vmatpush1.msra.mxu0 0.0
        %1234 = vmatprep.subr.mxu0 0.0
        %1235 = vmatpush1.msra.mxu0 0.0
        %1236 = vmatprep.subr.mxu0 0.0
        %1237 = vmatpush1.msra.mxu0 0.0
        %1238 = vmatprep.subr.mxu0 0.0
        %1239 = vmatpush1.msra.mxu0 0.0
        %1240 = vmatprep.subr.mxu0 0.0
        %1241 = vmatpush1.msra.mxu0 0.0
        %1242 = vmatprep.subr.mxu0 0.0
        %1243 = vmatpush1.msra.mxu0 0.0
        %1244 = vmatprep.subr.mxu0 0.0
        %1245 = vmatpush1.msra.mxu0 0.0
        %1246 = vmatprep.subr.mxu0 0.0
        %1247 = vmatpush1.msra.mxu0 0.0
        %1248 = vmatprep.subr.mxu0 0.0
        %1249 = vmatpush1.msra.mxu0 0.0
        %1250 = vmatprep.subr.mxu0 0.0
        %1251 = vmatpush1.msra.mxu0 0.0
        %1252 = vmatprep.subr.mxu0 0.0
        %1253 = vmatpush1.msra.mxu0 0.0
        %1254 = vmatprep.subr.mxu0 0.0
        %1255 = vmatpush1.msra.mxu0 %v440
        %1256 = vmatprep.subr.mxu0 0.0
        %1257 = vmatpush1.msra.mxu0 %v439
        %1258 = vmatprep.subr.mxu0 0.0
        %1259 = vmatpush1.msra.mxu0 %v438
        %1260 = vmatprep.subr.mxu0 0.0
        %1261 = vmatpush1.msra.mxu0 %v437
        %1262 = vmatprep.subr.mxu0 0.0
        %1263 = vmatpush2.msra.mxu0 0.0
        %1264 = vmatprep.subr.mxu0 0.0
        %1265 = vmatpush2.msra.mxu0 0.0
        %1266 = vmatprep.subr.mxu0 0.0
        %1267 = vmatpush2.msra.mxu0 0.0
        %1268 = vmatprep.subr.mxu0 0.0
        %1269 = vmatpush2.msra.mxu0 0.0
        %1270 = vmatprep.subr.mxu0 0.0
        %1271 = vmatpush2.msra.mxu0 0.0
        %1272 = vmatprep.subr.mxu0 0.0
        %1273 = vmatpush2.msra.mxu0 0.0
        %1274 = vmatprep.subr.mxu0 0.0
        %1275 = vmatpush2.msra.mxu0 0.0
        %1276 = vmatprep.subr.mxu0 0.0
        %1277 = vmatpush2.msra.mxu0 0.0
        %1278 = vmatprep.subr.mxu0 0.0
        %1279 = vmatpush2.msra.mxu0 0.0
        %1280 = vmatprep.subr.mxu0 0.0
        %1281 = vmatpush2.msra.mxu0 0.0
        %1282 = vmatprep.subr.mxu0 0.0
        %1283 = vmatpush2.msra.mxu0 0.0
        %1284 = vmatprep.subr.mxu0 0.0
        %1285 = vmatpush2.msra.mxu0 0.0
        %1286 = vmatprep.subr.mxu0 0.0
        %1287 = vmatpush2.msra.mxu0 0.0
        %1288 = vmatprep.subr.mxu0 0.0
        %1289 = vmatpush2.msra.mxu0 0.0
        %1290 = vmatprep.subr.mxu0 0.0
        %1291 = vmatpush2.msra.mxu0 0.0
        %1292 = vmatprep.subr.mxu0 0.0
        %1293 = vmatpush2.msra.mxu0 0.0
        %1294 = vmatprep.mubr.f32.mxu0 0.0
        %1295 = vmatmul.mubr.f32.gmra.mxu0 %v1219
        %v1296 = vpop.f32.mrf.mxu0
        %v1297 = vadd.f32 0.0, %v1296
        %v1298 = vpop.f32.mrf.mxu0
        %1299 = vmatprep.mubr.f32.mxu0 0.0
        %1300 = vmatmul.mubr.f32.gmra.mxu0 %v1222
        %v1301 = vpop.f32.mrf.mxu0
        %v1302 = vadd.f32 0.0, %v1301
        %v1303 = vpop.f32.mrf.mxu0
        %1304 = vmatprep.mubr.f32.mxu0 0.0
        %1305 = vmatmul.mubr.f32.gmra.mxu0 %v1225
        %v1306 = vpop.f32.mrf.mxu0
        %v1307 = vadd.f32 0.0, %v1306
        %v1308 = vpop.f32.mrf.mxu0
        %1309 = vmatprep.mubr.f32.mxu0 0.0
        %1310 = vmatmul.mubr.f32.gmra.mxu0 %v1228
        %v1311 = vpop.f32.mrf.mxu0
        %v1312 = vadd.f32 0.0, %v1311
        %v1313 = vpop.f32.mrf.mxu0
        %1314 = vdwg.mxu0
        %v1315 = vadd.f32 %v1112, %v1297
        %v1316 = vadd.f32 %v1113, %v1302
        %v1317 = vadd.f32 %v1114, %v1307
        %v1318 = vadd.f32 %v1115, %v1312
        %v1319 = vadd.f32 %v1315, %v614
        %v1320 = vadd.f32 %v1316, %v615
        %v1321 = vadd.f32 %v1317, %v616
        %v1322 = vadd.f32 %v1318, %v617
        %s1323 = scalar_lea.vmem %s3, 32
        %v1324 = vld [vmem:[%s1323] sm:$0xff]
        %v1325 = vld [vmem:[%s1323 + $0x8] sm:$0xff]
        %v1326 = vld [vmem:[%s1323 + $0x10] sm:$0xff]
        %v1327 = vld [vmem:[%s1323 + $0x18] sm:$0xff]
        %s1328 = scalar_lea.vmem %s355, 32 [#allocation2]
        %v1329 = vld [vmem:[%s1328] sm:$0xff]
        %v1330 = vld [vmem:[%s1328 + $0x8] sm:$0xff]
        %v1331 = vld [vmem:[%s1328 + $0x10] sm:$0xff]
        %v1332 = vld [vmem:[%s1328 + $0x18] sm:$0xff]
        %s1333 = scalar_lea.vmem %s6, 128
        %v1334 = vld [vmem:[%s1333] sm:$0xff]
        %v1335 = vld [vmem:[%s1333 + $0x8] sm:$0xff]
        %v1336 = vld [vmem:[%s1333 + $0x10] sm:$0xff]
        %v1337 = vld [vmem:[%s1333 + $0x18] sm:$0xff]
        %v1338 = vld [vmem:[%s1333 + $0x20] sm:$0xff]
        %v1339 = vld [vmem:[%s1333 + $0x28] sm:$0xff]
        %v1340 = vld [vmem:[%s1333 + $0x30] sm:$0xff]
        %v1341 = vld [vmem:[%s1333 + $0x38] sm:$0xff]
        %v1342 = vld [vmem:[%s1333 + $0x40] sm:$0xff]
        %v1343 = vld [vmem:[%s1333 + $0x48] sm:$0xff]
        %v1344 = vld [vmem:[%s1333 + $0x50] sm:$0xff]
        %v1345 = vld [vmem:[%s1333 + $0x58] sm:$0xff]
        %v1346 = vld [vmem:[%s1333 + $0x60] sm:$0xff]
        %v1347 = vld [vmem:[%s1333 + $0x68] sm:$0xff]
        %v1348 = vld [vmem:[%s1333 + $0x70] sm:$0xff]
        %v1349 = vld [vmem:[%s1333 + $0x78] sm:$0xff]
        %v1351 = vsel %vm441, %v1319, 0
        %v1354 = vsel %vm441, %v1320, 0
        %v1357 = vsel %vm441, %v1321, 0
        %v1360 = vsel %vm441, %v1322, 0
        %1362 = vmatprep.subr.mxu0 0.0
        %1363 = vmatpush1.msra.mxu0 0.0
        %1364 = vmatprep.subr.mxu0 0.0
        %1365 = vmatpush1.msra.mxu0 0.0
        %1366 = vmatprep.subr.mxu0 0.0
        %1367 = vmatpush1.msra.mxu0 0.0
        %1368 = vmatprep.subr.mxu0 0.0
        %1369 = vmatpush1.msra.mxu0 0.0
        %1370 = vmatprep.subr.mxu0 0.0
        %1371 = vmatpush1.msra.mxu0 0.0
        %1372 = vmatprep.subr.mxu0 0.0
        %1373 = vmatpush1.msra.mxu0 0.0
        %1374 = vmatprep.subr.mxu0 0.0
        %1375 = vmatpush1.msra.mxu0 0.0
        %1376 = vmatprep.subr.mxu0 0.0
        %1377 = vmatpush1.msra.mxu0 0.0
        %1378 = vmatprep.subr.mxu0 0.0
        %1379 = vmatpush1.msra.mxu0 0.0
        %1380 = vmatprep.subr.mxu0 0.0
        %1381 = vmatpush1.msra.mxu0 0.0
        %1382 = vmatprep.subr.mxu0 0.0
        %1383 = vmatpush1.msra.mxu0 0.0
        %1384 = vmatprep.subr.mxu0 0.0
        %1385 = vmatpush1.msra.mxu0 0.0
        %1386 = vmatprep.subr.mxu0 0.0
        %1387 = vmatpush1.msra.mxu0 %v1327
        %1388 = vmatprep.subr.mxu0 0.0
        %1389 = vmatpush1.msra.mxu0 %v1326
        %1390 = vmatprep.subr.mxu0 0.0
        %1391 = vmatpush1.msra.mxu0 %v1325
        %1392 = vmatprep.subr.mxu0 0.0
        %1393 = vmatpush1.msra.mxu0 %v1324
        %1394 = vmatprep.subr.mxu0 0.0
        %1395 = vmatpush2.msra.mxu0 0.0
        %1396 = vmatprep.subr.mxu0 0.0
        %1397 = vmatpush2.msra.mxu0 0.0
        %1398 = vmatprep.subr.mxu0 0.0
        %1399 = vmatpush2.msra.mxu0 0.0
        %1400 = vmatprep.subr.mxu0 0.0
        %1401 = vmatpush2.msra.mxu0 0.0
        %1402 = vmatprep.subr.mxu0 0.0
        %1403 = vmatpush2.msra.mxu0 0.0
        %1404 = vmatprep.subr.mxu0 0.0
        %1405 = vmatpush2.msra.mxu0 0.0
        %1406 = vmatprep.subr.mxu0 0.0
        %1407 = vmatpush2.msra.mxu0 0.0
        %1408 = vmatprep.subr.mxu0 0.0
        %1409 = vmatpush2.msra.mxu0 0.0
        %1410 = vmatprep.subr.mxu0 0.0
        %1411 = vmatpush2.msra.mxu0 0.0
        %1412 = vmatprep.subr.mxu0 0.0
        %1413 = vmatpush2.msra.mxu0 0.0
        %1414 = vmatprep.subr.mxu0 0.0
        %1415 = vmatpush2.msra.mxu0 0.0
        %1416 = vmatprep.subr.mxu0 0.0
        %1417 = vmatpush2.msra.mxu0 0.0
        %1418 = vmatprep.subr.mxu0 0.0
        %1419 = vmatpush2.msra.mxu0 0.0
        %1420 = vmatprep.subr.mxu0 0.0
        %1421 = vmatpush2.msra.mxu0 0.0
        %1422 = vmatprep.subr.mxu0 0.0
        %1423 = vmatpush2.msra.mxu0 0.0
        %1424 = vmatprep.subr.mxu0 0.0
        %1425 = vmatpush2.msra.mxu0 0.0
        %1426 = vmatprep.mubr.f32.mxu0 0.0
        %1427 = vmatmul.mubr.f32.gmra.mxu0 %v1351
        %v1428 = vpop.f32.mrf.mxu0
        %v1429 = vadd.f32 %v1329, %v1428
        %v1430 = vpop.f32.mrf.mxu0
        %1431 = vmatprep.mubr.f32.mxu0 0.0
        %1432 = vmatmul.mubr.f32.gmra.mxu0 %v1354
        %v1433 = vpop.f32.mrf.mxu0
        %v1434 = vadd.f32 %v1330, %v1433
        %v1435 = vpop.f32.mrf.mxu0
        %1436 = vmatprep.mubr.f32.mxu0 0.0
        %1437 = vmatmul.mubr.f32.gmra.mxu0 %v1357
        %v1438 = vpop.f32.mrf.mxu0
        %v1439 = vadd.f32 %v1331, %v1438
        %v1440 = vpop.f32.mrf.mxu0
        %1441 = vmatprep.mubr.f32.mxu0 0.0
        %1442 = vmatmul.mubr.f32.gmra.mxu0 %v1360
        %v1443 = vpop.f32.mrf.mxu0
        %v1444 = vadd.f32 %v1332, %v1443
        %v1445 = vpop.f32.mrf.mxu0
        %1446 = vdwg.mxu0
        %v1447 = vsel %vm441, %v1429, 0.0
        %1448 = vadd.xlane.f32.xlu0 %v1447
        %v1449 = vpop.xlane.xlu0 %1448
        %v1450 = vsel %vm441, %v1434, 0.0
        %1451 = vadd.xlane.f32.xlu0 %v1450
        %v1452 = vpop.xlane.xlu0 %1451
        %v1453 = vsel %vm441, %v1439, 0.0
        %1454 = vadd.xlane.f32.xlu0 %v1453
        %v1455 = vpop.xlane.xlu0 %1454
        %v1456 = vsel %vm441, %v1444, 0.0
        %1457 = vadd.xlane.f32.xlu0 %v1456
        %v1458 = vpop.xlane.xlu0 %1457
        %v1459 = vmul.f32 %v1449, %v551
        %v1460 = vmul.f32 %v1452, %v551
        %v1461 = vmul.f32 %v1455, %v551
        %v1462 = vmul.f32 %v1458, %v551
        %v1463 = vsub.f32 %v1429, %v1459
        %v1464 = vsub.f32 %v1434, %v1460
        %v1465 = vsub.f32 %v1439, %v1461
        %v1466 = vsub.f32 %v1444, %v1462
        %v1467 = vmul.f32 %v1463, %v1463
        %v1468 = vmul.f32 %v1464, %v1464
        %v1469 = vmul.f32 %v1465, %v1465
        %v1470 = vmul.f32 %v1466, %v1466
        %v1471 = vsel %vm441, %v1467, 0.0
        %1472 = vadd.xlane.f32.xlu0 %v1471
        %v1473 = vpop.xlane.xlu0 %1472
        %v1474 = vsel %vm441, %v1468, 0.0
        %1475 = vadd.xlane.f32.xlu0 %v1474
        %v1476 = vpop.xlane.xlu0 %1475
        %v1477 = vsel %vm441, %v1469, 0.0
        %1478 = vadd.xlane.f32.xlu0 %v1477
        %v1479 = vpop.xlane.xlu0 %1478
        %v1480 = vsel %vm441, %v1470, 0.0
        %1481 = vadd.xlane.f32.xlu0 %v1480
        %v1482 = vpop.xlane.xlu0 %1481
        %v1483 = vmul.f32 %v1473, %v551
        %v1484 = vmul.f32 %v1476, %v551
        %v1485 = vmul.f32 %v1479, %v551
        %v1486 = vmul.f32 %v1482, %v551
        %v1487 = vadd.f32 %v1483, 1e-05
        %v1488 = vadd.f32 %v1484, 1e-05
        %v1489 = vadd.f32 %v1485, 1e-05
        %v1490 = vadd.f32 %v1486, 1e-05
        %v1491 = vrsqrt.pop %v1487
        %v1492 = vrsqrt.pop %v1488
        %v1493 = vrsqrt.pop %v1489
        %v1494 = vrsqrt.pop %v1490
        %v1495 = vmul.f32 %v1463, %v1491
        %v1496 = vmul.f32 %v1464, %v1492
        %v1497 = vmul.f32 %v1465, %v1493
        %v1498 = vmul.f32 %v1466, %v1494
        %s1499 = scalar_lea.vmem %s4, 1
        %v1500 = vld [vmem:[%s1499] sm:$0x1]
        %v1502 = vlaneseq
        %v1503 = vshrl.u32 %v1502, 7
        %v1504 = vsub.s32 0, %v1503
        %v1505 = vrot.slane %v1500, %v1504
        %v1507 = vmul.f32 %v1495, %v1505
        %v1508 = vmul.f32 %v1496, %v1505
        %v1509 = vmul.f32 %v1497, %v1505
        %v1510 = vmul.f32 %v1498, %v1505
        %s1511 = scalar_lea.vmem %s5, 1
        %v1512 = vld [vmem:[%s1511] sm:$0x1]
        %v1514 = vlaneseq
        %v1515 = vshrl.u32 %v1514, 7
        %v1516 = vsub.s32 0, %v1515
        %v1517 = vrot.slane %v1512, %v1516
        %v1519 = vadd.f32 %v1507, %v1517
        %v1520 = vadd.f32 %v1508, %v1517
        %v1521 = vadd.f32 %v1509, %v1517
        %v1522 = vadd.f32 %v1510, %v1517
        %v1523 = vtanh.pop %v1519
        %v1524 = vtanh.pop %v1520
        %v1525 = vtanh.pop %v1521
        %v1526 = vtanh.pop %v1522
        %1527 = vmatprep.subr.mxu0 0.0
        %1528 = vmatpush1.msra.mxu0 0.0
        %1529 = vmatprep.subr.mxu0 0.0
        %1530 = vmatpush1.msra.mxu0 0.0
        %1531 = vmatprep.subr.mxu0 0.0
        %1532 = vmatpush1.msra.mxu0 0.0
        %1533 = vmatprep.subr.mxu0 0.0
        %1534 = vmatpush1.msra.mxu0 0.0
        %1535 = vmatprep.subr.mxu0 0.0
        %1536 = vmatpush1.msra.mxu0 0.0
        %1537 = vmatprep.subr.mxu0 0.0
        %1538 = vmatpush1.msra.mxu0 0.0
        %1539 = vmatprep.subr.mxu0 0.0
        %1540 = vmatpush1.msra.mxu0 0.0
        %1541 = vmatprep.subr.mxu0 0.0
        %1542 = vmatpush1.msra.mxu0 0.0
        %1543 = vmatprep.subr.mxu0 0.0
        %1544 = vmatpush1.msra.mxu0 0.0
        %1545 = vmatprep.subr.mxu0 0.0
        %1546 = vmatpush1.msra.mxu0 0.0
        %1547 = vmatprep.subr.mxu0 0.0
        %1548 = vmatpush1.msra.mxu0 0.0
        %1549 = vmatprep.subr.mxu0 0.0
        %1550 = vmatpush1.msra.mxu0 0.0
        %1551 = vmatprep.subr.mxu0 0.0
        %1552 = vmatpush1.msra.mxu0 %v1526
        %1553 = vmatprep.subr.mxu0 0.0
        %1554 = vmatpush1.msra.mxu0 %v1525
        %1555 = vmatprep.subr.mxu0 0.0
        %1556 = vmatpush1.msra.mxu0 %v1524
        %1557 = vmatprep.subr.mxu0 0.0
        %1558 = vmatpush1.msra.mxu0 %v1523
        %1559 = vmatprep.subr.mxu0 0.0
        %1560 = vmatpush2.msra.mxu0 0.0
        %1561 = vmatprep.subr.mxu0 0.0
        %1562 = vmatpush2.msra.mxu0 0.0
        %1563 = vmatprep.subr.mxu0 0.0
        %1564 = vmatpush2.msra.mxu0 0.0
        %1565 = vmatprep.subr.mxu0 0.0
        %1566 = vmatpush2.msra.mxu0 0.0
        %1567 = vmatprep.subr.mxu0 0.0
        %1568 = vmatpush2.msra.mxu0 0.0
        %1569 = vmatprep.subr.mxu0 0.0
        %1570 = vmatpush2.msra.mxu0 0.0
        %1571 = vmatprep.subr.mxu0 0.0
        %1572 = vmatpush2.msra.mxu0 0.0
        %1573 = vmatprep.subr.mxu0 0.0
        %1574 = vmatpush2.msra.mxu0 0.0
        %1575 = vmatprep.subr.mxu0 0.0
        %1576 = vmatpush2.msra.mxu0 0.0
        %1577 = vmatprep.subr.mxu0 0.0
        %1578 = vmatpush2.msra.mxu0 0.0
        %1579 = vmatprep.subr.mxu0 0.0
        %1580 = vmatpush2.msra.mxu0 0.0
        %1581 = vmatprep.subr.mxu0 0.0
        %1582 = vmatpush2.msra.mxu0 0.0
        %1583 = vmatprep.subr.mxu0 0.0
        %1584 = vmatpush2.msra.mxu0 0.0
        %1585 = vmatprep.subr.mxu0 0.0
        %1586 = vmatpush2.msra.mxu0 0.0
        %1587 = vmatprep.subr.mxu0 0.0
        %1588 = vmatpush2.msra.mxu0 0.0
        %1589 = vmatprep.subr.mxu0 0.0
        %1590 = vmatpush2.msra.mxu0 0.0
        %1591 = vmatprep.mubr.f32.mxu0 0.0
        %1592 = vmatmul.mubr.f32.gmra.mxu0 %v623
        %v1593 = vpop.f32.mrf.mxu0
        %v1594 = vadd.f32 0.0, %v1593
        %v1595 = vpop.f32.mrf.mxu0
        %1596 = vmatprep.mubr.f32.mxu0 0.0
        %1597 = vmatmul.mubr.f32.gmra.mxu0 %v626
        %v1598 = vpop.f32.mrf.mxu0
        %v1599 = vadd.f32 0.0, %v1598
        %v1600 = vpop.f32.mrf.mxu0
        %1601 = vmatprep.mubr.f32.mxu0 0.0
        %1602 = vmatmul.mubr.f32.gmra.mxu0 %v629
        %v1603 = vpop.f32.mrf.mxu0
        %v1604 = vadd.f32 0.0, %v1603
        %v1605 = vpop.f32.mrf.mxu0
        %1606 = vmatprep.mubr.f32.mxu0 0.0
        %1607 = vmatmul.mubr.f32.gmra.mxu0 %v632
        %v1608 = vpop.f32.mrf.mxu0
        %v1609 = vadd.f32 0.0, %v1608
        %v1610 = vpop.f32.mrf.mxu0
        %1611 = vdwg.mxu0
        %v1613 = vsel %vm441, %v1594, 0
        %v1616 = vsel %vm441, %v1599, 0
        %v1619 = vsel %vm441, %v1604, 0
        %v1622 = vsel %vm441, %v1609, 0
        %1624 = vmatprep.subr.mxu0 0.0
        %1625 = vmatpush1.msra.mxu0 0.0
        %1626 = vmatprep.subr.mxu0 0.0
        %1627 = vmatpush1.msra.mxu0 0.0
        %1628 = vmatprep.subr.mxu0 0.0
        %1629 = vmatpush1.msra.mxu0 0.0
        %1630 = vmatprep.subr.mxu0 0.0
        %1631 = vmatpush1.msra.mxu0 0.0
        %1632 = vmatprep.subr.mxu0 0.0
        %1633 = vmatpush1.msra.mxu0 0.0
        %1634 = vmatprep.subr.mxu0 0.0
        %1635 = vmatpush1.msra.mxu0 0.0
        %1636 = vmatprep.subr.mxu0 0.0
        %1637 = vmatpush1.msra.mxu0 0.0
        %1638 = vmatprep.subr.mxu0 0.0
        %1639 = vmatpush1.msra.mxu0 0.0
        %1640 = vmatprep.subr.mxu0 0.0
        %1641 = vmatpush1.msra.mxu0 0.0
        %1642 = vmatprep.subr.mxu0 0.0
        %1643 = vmatpush1.msra.mxu0 0.0
        %1644 = vmatprep.subr.mxu0 0.0
        %1645 = vmatpush1.msra.mxu0 0.0
        %1646 = vmatprep.subr.mxu0 0.0
        %1647 = vmatpush1.msra.mxu0 0.0
        %1648 = vmatprep.subr.mxu0 0.0
        %1649 = vmatpush1.msra.mxu0 %v1341
        %1650 = vmatprep.subr.mxu0 0.0
        %1651 = vmatpush1.msra.mxu0 %v1340
        %1652 = vmatprep.subr.mxu0 0.0
        %1653 = vmatpush1.msra.mxu0 %v1339
        %1654 = vmatprep.subr.mxu0 0.0
        %1655 = vmatpush1.msra.mxu0 %v1338
        %1656 = vmatprep.subr.mxu0 0.0
        %1657 = vmatpush2.msra.mxu0 0.0
        %1658 = vmatprep.subr.mxu0 0.0
        %1659 = vmatpush2.msra.mxu0 0.0
        %1660 = vmatprep.subr.mxu0 0.0
        %1661 = vmatpush2.msra.mxu0 0.0
        %1662 = vmatprep.subr.mxu0 0.0
        %1663 = vmatpush2.msra.mxu0 0.0
        %1664 = vmatprep.subr.mxu0 0.0
        %1665 = vmatpush2.msra.mxu0 0.0
        %1666 = vmatprep.subr.mxu0 0.0
        %1667 = vmatpush2.msra.mxu0 0.0
        %1668 = vmatprep.subr.mxu0 0.0
        %1669 = vmatpush2.msra.mxu0 0.0
        %1670 = vmatprep.subr.mxu0 0.0
        %1671 = vmatpush2.msra.mxu0 0.0
        %1672 = vmatprep.subr.mxu0 0.0
        %1673 = vmatpush2.msra.mxu0 0.0
        %1674 = vmatprep.subr.mxu0 0.0
        %1675 = vmatpush2.msra.mxu0 0.0
        %1676 = vmatprep.subr.mxu0 0.0
        %1677 = vmatpush2.msra.mxu0 0.0
        %1678 = vmatprep.subr.mxu0 0.0
        %1679 = vmatpush2.msra.mxu0 0.0
        %1680 = vmatprep.subr.mxu0 0.0
        %1681 = vmatpush2.msra.mxu0 0.0
        %1682 = vmatprep.subr.mxu0 0.0
        %1683 = vmatpush2.msra.mxu0 0.0
        %1684 = vmatprep.subr.mxu0 0.0
        %1685 = vmatpush2.msra.mxu0 0.0
        %1686 = vmatprep.subr.mxu0 0.0
        %1687 = vmatpush2.msra.mxu0 0.0
        %1688 = vmatprep.mubr.f32.mxu0 0.0
        %1689 = vmatmul.mubr.f32.gmra.mxu0 %v1613
        %v1690 = vpop.f32.mrf.mxu0
        %v1691 = vadd.f32 0.0, %v1690
        %v1692 = vpop.f32.mrf.mxu0
        %1693 = vmatprep.mubr.f32.mxu0 0.0
        %1694 = vmatmul.mubr.f32.gmra.mxu0 %v1616
        %v1695 = vpop.f32.mrf.mxu0
        %v1696 = vadd.f32 0.0, %v1695
        %v1697 = vpop.f32.mrf.mxu0
        %1698 = vmatprep.mubr.f32.mxu0 0.0
        %1699 = vmatmul.mubr.f32.gmra.mxu0 %v1619
        %v1700 = vpop.f32.mrf.mxu0
        %v1701 = vadd.f32 0.0, %v1700
        %v1702 = vpop.f32.mrf.mxu0
        %1703 = vmatprep.mubr.f32.mxu0 0.0
        %1704 = vmatmul.mubr.f32.gmra.mxu0 %v1622
        %v1705 = vpop.f32.mrf.mxu0
        %v1706 = vadd.f32 0.0, %v1705
        %v1707 = vpop.f32.mrf.mxu0
        %1708 = vdwg.mxu0
        %v1710 = vsel %vm441, %v1523, 0
        %v1713 = vsel %vm441, %v1524, 0
        %v1716 = vsel %vm441, %v1525, 0
        %v1719 = vsel %vm441, %v1526, 0
        %1721 = vmatprep.subr.mxu0 0.0
        %1722 = vmatpush1.msra.mxu0 0.0
        %1723 = vmatprep.subr.mxu0 0.0
        %1724 = vmatpush1.msra.mxu0 0.0
        %1725 = vmatprep.subr.mxu0 0.0
        %1726 = vmatpush1.msra.mxu0 0.0
        %1727 = vmatprep.subr.mxu0 0.0
        %1728 = vmatpush1.msra.mxu0 0.0
        %1729 = vmatprep.subr.mxu0 0.0
        %1730 = vmatpush1.msra.mxu0 0.0
        %1731 = vmatprep.subr.mxu0 0.0
        %1732 = vmatpush1.msra.mxu0 0.0
        %1733 = vmatprep.subr.mxu0 0.0
        %1734 = vmatpush1.msra.mxu0 0.0
        %1735 = vmatprep.subr.mxu0 0.0
        %1736 = vmatpush1.msra.mxu0 0.0
        %1737 = vmatprep.subr.mxu0 0.0
        %1738 = vmatpush1.msra.mxu0 0.0
        %1739 = vmatprep.subr.mxu0 0.0
        %1740 = vmatpush1.msra.mxu0 0.0
        %1741 = vmatprep.subr.mxu0 0.0
        %1742 = vmatpush1.msra.mxu0 0.0
        %1743 = vmatprep.subr.mxu0 0.0
        %1744 = vmatpush1.msra.mxu0 0.0
        %1745 = vmatprep.subr.mxu0 0.0
        %1746 = vmatpush1.msra.mxu0 %v1337
        %1747 = vmatprep.subr.mxu0 0.0
        %1748 = vmatpush1.msra.mxu0 %v1336
        %1749 = vmatprep.subr.mxu0 0.0
        %1750 = vmatpush1.msra.mxu0 %v1335
        %1751 = vmatprep.subr.mxu0 0.0
        %1752 = vmatpush1.msra.mxu0 %v1334
        %1753 = vmatprep.subr.mxu0 0.0
        %1754 = vmatpush2.msra.mxu0 0.0
        %1755 = vmatprep.subr.mxu0 0.0
        %1756 = vmatpush2.msra.mxu0 0.0
        %1757 = vmatprep.subr.mxu0 0.0
        %1758 = vmatpush2.msra.mxu0 0.0
        %1759 = vmatprep.subr.mxu0 0.0
        %1760 = vmatpush2.msra.mxu0 0.0
        %1761 = vmatprep.subr.mxu0 0.0
        %1762 = vmatpush2.msra.mxu0 0.0
        %1763 = vmatprep.subr.mxu0 0.0
        %1764 = vmatpush2.msra.mxu0 0.0
        %1765 = vmatprep.subr.mxu0 0.0
        %1766 = vmatpush2.msra.mxu0 0.0
        %1767 = vmatprep.subr.mxu0 0.0
        %1768 = vmatpush2.msra.mxu0 0.0
        %1769 = vmatprep.subr.mxu0 0.0
        %1770 = vmatpush2.msra.mxu0 0.0
        %1771 = vmatprep.subr.mxu0 0.0
        %1772 = vmatpush2.msra.mxu0 0.0
        %1773 = vmatprep.subr.mxu0 0.0
        %1774 = vmatpush2.msra.mxu0 0.0
        %1775 = vmatprep.subr.mxu0 0.0
        %1776 = vmatpush2.msra.mxu0 0.0
        %1777 = vmatprep.subr.mxu0 0.0
        %1778 = vmatpush2.msra.mxu0 0.0
        %1779 = vmatprep.subr.mxu0 0.0
        %1780 = vmatpush2.msra.mxu0 0.0
        %1781 = vmatprep.subr.mxu0 0.0
        %1782 = vmatpush2.msra.mxu0 0.0
        %1783 = vmatprep.subr.mxu0 0.0
        %1784 = vmatpush2.msra.mxu0 0.0
        %1785 = vmatprep.mubr.f32.mxu0 0.0
        %1786 = vmatmul.mubr.f32.gmra.mxu0 %v1710
        %v1787 = vpop.f32.mrf.mxu0
        %v1788 = vadd.f32 %v1691, %v1787
        %v1789 = vpop.f32.mrf.mxu0
        %1790 = vmatprep.mubr.f32.mxu0 0.0
        %1791 = vmatmul.mubr.f32.gmra.mxu0 %v1713
        %v1792 = vpop.f32.mrf.mxu0
        %v1793 = vadd.f32 %v1696, %v1792
        %v1794 = vpop.f32.mrf.mxu0
        %1795 = vmatprep.mubr.f32.mxu0 0.0
        %1796 = vmatmul.mubr.f32.gmra.mxu0 %v1716
        %v1797 = vpop.f32.mrf.mxu0
        %v1798 = vadd.f32 %v1701, %v1797
        %v1799 = vpop.f32.mrf.mxu0
        %1800 = vmatprep.mubr.f32.mxu0 0.0
        %1801 = vmatmul.mubr.f32.gmra.mxu0 %v1719
        %v1802 = vpop.f32.mrf.mxu0
        %v1803 = vadd.f32 %v1706, %v1802
        %v1804 = vpop.f32.mrf.mxu0
        %1805 = vdwg.mxu0
        %1806 = vmatprep.subr.mxu0 0.0
        %1807 = vmatpush1.msra.mxu0 0.0
        %1808 = vmatprep.subr.mxu0 0.0
        %1809 = vmatpush1.msra.mxu0 0.0
        %1810 = vmatprep.subr.mxu0 0.0
        %1811 = vmatpush1.msra.mxu0 0.0
        %1812 = vmatprep.subr.mxu0 0.0
        %1813 = vmatpush1.msra.mxu0 0.0
        %1814 = vmatprep.subr.mxu0 0.0
        %1815 = vmatpush1.msra.mxu0 0.0
        %1816 = vmatprep.subr.mxu0 0.0
        %1817 = vmatpush1.msra.mxu0 0.0
        %1818 = vmatprep.subr.mxu0 0.0
        %1819 = vmatpush1.msra.mxu0 0.0
        %1820 = vmatprep.subr.mxu0 0.0
        %1821 = vmatpush1.msra.mxu0 0.0
        %1822 = vmatprep.subr.mxu0 0.0
        %1823 = vmatpush1.msra.mxu0 0.0
        %1824 = vmatprep.subr.mxu0 0.0
        %1825 = vmatpush1.msra.mxu0 0.0
        %1826 = vmatprep.subr.mxu0 0.0
        %1827 = vmatpush1.msra.mxu0 0.0
        %1828 = vmatprep.subr.mxu0 0.0
        %1829 = vmatpush1.msra.mxu0 0.0
        %1830 = vmatprep.subr.mxu0 0.0
        %1831 = vmatpush1.msra.mxu0 %v1526
        %1832 = vmatprep.subr.mxu0 0.0
        %1833 = vmatpush1.msra.mxu0 %v1525
        %1834 = vmatprep.subr.mxu0 0.0
        %1835 = vmatpush1.msra.mxu0 %v1524
        %1836 = vmatprep.subr.mxu0 0.0
        %1837 = vmatpush1.msra.mxu0 %v1523
        %1838 = vmatprep.subr.mxu0 0.0
        %1839 = vmatpush2.msra.mxu0 0.0
        %1840 = vmatprep.subr.mxu0 0.0
        %1841 = vmatpush2.msra.mxu0 0.0
        %1842 = vmatprep.subr.mxu0 0.0
        %1843 = vmatpush2.msra.mxu0 0.0
        %1844 = vmatprep.subr.mxu0 0.0
        %1845 = vmatpush2.msra.mxu0 0.0
        %1846 = vmatprep.subr.mxu0 0.0
        %1847 = vmatpush2.msra.mxu0 0.0
        %1848 = vmatprep.subr.mxu0 0.0
        %1849 = vmatpush2.msra.mxu0 0.0
        %1850 = vmatprep.subr.mxu0 0.0
        %1851 = vmatpush2.msra.mxu0 0.0
        %1852 = vmatprep.subr.mxu0 0.0
        %1853 = vmatpush2.msra.mxu0 0.0
        %1854 = vmatprep.subr.mxu0 0.0
        %1855 = vmatpush2.msra.mxu0 0.0
        %1856 = vmatprep.subr.mxu0 0.0
        %1857 = vmatpush2.msra.mxu0 0.0
        %1858 = vmatprep.subr.mxu0 0.0
        %1859 = vmatpush2.msra.mxu0 0.0
        %1860 = vmatprep.subr.mxu0 0.0
        %1861 = vmatpush2.msra.mxu0 0.0
        %1862 = vmatprep.subr.mxu0 0.0
        %1863 = vmatpush2.msra.mxu0 0.0
        %1864 = vmatprep.subr.mxu0 0.0
        %1865 = vmatpush2.msra.mxu0 0.0
        %1866 = vmatprep.subr.mxu0 0.0
        %1867 = vmatpush2.msra.mxu0 0.0
        %1868 = vmatprep.subr.mxu0 0.0
        %1869 = vmatpush2.msra.mxu0 0.0
        %1870 = vmatprep.mubr.f32.mxu0 0.0
        %1871 = vmatmul.mubr.f32.gmra.mxu0 %v919
        %v1872 = vpop.f32.mrf.mxu0
        %v1873 = vadd.f32 0.0, %v1872
        %v1874 = vpop.f32.mrf.mxu0
        %1875 = vmatprep.mubr.f32.mxu0 0.0
        %1876 = vmatmul.mubr.f32.gmra.mxu0 %v922
        %v1877 = vpop.f32.mrf.mxu0
        %v1878 = vadd.f32 0.0, %v1877
        %v1879 = vpop.f32.mrf.mxu0
        %1880 = vmatprep.mubr.f32.mxu0 0.0
        %1881 = vmatmul.mubr.f32.gmra.mxu0 %v925
        %v1882 = vpop.f32.mrf.mxu0
        %v1883 = vadd.f32 0.0, %v1882
        %v1884 = vpop.f32.mrf.mxu0
        %1885 = vmatprep.mubr.f32.mxu0 0.0
        %1886 = vmatmul.mubr.f32.gmra.mxu0 %v928
        %v1887 = vpop.f32.mrf.mxu0
        %v1888 = vadd.f32 0.0, %v1887
        %v1889 = vpop.f32.mrf.mxu0
        %1890 = vdwg.mxu0
        %v1892 = vsel %vm441, %v1873, 0
        %v1895 = vsel %vm441, %v1878, 0
        %v1898 = vsel %vm441, %v1883, 0
        %v1901 = vsel %vm441, %v1888, 0
        %1903 = vmatprep.subr.mxu0 0.0
        %1904 = vmatpush1.msra.mxu0 0.0
        %1905 = vmatprep.subr.mxu0 0.0
        %1906 = vmatpush1.msra.mxu0 0.0
        %1907 = vmatprep.subr.mxu0 0.0
        %1908 = vmatpush1.msra.mxu0 0.0
        %1909 = vmatprep.subr.mxu0 0.0
        %1910 = vmatpush1.msra.mxu0 0.0
        %1911 = vmatprep.subr.mxu0 0.0
        %1912 = vmatpush1.msra.mxu0 0.0
        %1913 = vmatprep.subr.mxu0 0.0
        %1914 = vmatpush1.msra.mxu0 0.0
        %1915 = vmatprep.subr.mxu0 0.0
        %1916 = vmatpush1.msra.mxu0 0.0
        %1917 = vmatprep.subr.mxu0 0.0
        %1918 = vmatpush1.msra.mxu0 0.0
        %1919 = vmatprep.subr.mxu0 0.0
        %1920 = vmatpush1.msra.mxu0 0.0
        %1921 = vmatprep.subr.mxu0 0.0
        %1922 = vmatpush1.msra.mxu0 0.0
        %1923 = vmatprep.subr.mxu0 0.0
        %1924 = vmatpush1.msra.mxu0 0.0
        %1925 = vmatprep.subr.mxu0 0.0
        %1926 = vmatpush1.msra.mxu0 0.0
        %1927 = vmatprep.subr.mxu0 0.0
        %1928 = vmatpush1.msra.mxu0 %v1345
        %1929 = vmatprep.subr.mxu0 0.0
        %1930 = vmatpush1.msra.mxu0 %v1344
        %1931 = vmatprep.subr.mxu0 0.0
        %1932 = vmatpush1.msra.mxu0 %v1343
        %1933 = vmatprep.subr.mxu0 0.0
        %1934 = vmatpush1.msra.mxu0 %v1342
        %1935 = vmatprep.subr.mxu0 0.0
        %1936 = vmatpush2.msra.mxu0 0.0
        %1937 = vmatprep.subr.mxu0 0.0
        %1938 = vmatpush2.msra.mxu0 0.0
        %1939 = vmatprep.subr.mxu0 0.0
        %1940 = vmatpush2.msra.mxu0 0.0
        %1941 = vmatprep.subr.mxu0 0.0
        %1942 = vmatpush2.msra.mxu0 0.0
        %1943 = vmatprep.subr.mxu0 0.0
        %1944 = vmatpush2.msra.mxu0 0.0
        %1945 = vmatprep.subr.mxu0 0.0
        %1946 = vmatpush2.msra.mxu0 0.0
        %1947 = vmatprep.subr.mxu0 0.0
        %1948 = vmatpush2.msra.mxu0 0.0
        %1949 = vmatprep.subr.mxu0 0.0
        %1950 = vmatpush2.msra.mxu0 0.0
        %1951 = vmatprep.subr.mxu0 0.0
        %1952 = vmatpush2.msra.mxu0 0.0
        %1953 = vmatprep.subr.mxu0 0.0
        %1954 = vmatpush2.msra.mxu0 0.0
        %1955 = vmatprep.subr.mxu0 0.0
        %1956 = vmatpush2.msra.mxu0 0.0
        %1957 = vmatprep.subr.mxu0 0.0
        %1958 = vmatpush2.msra.mxu0 0.0
        %1959 = vmatprep.subr.mxu0 0.0
        %1960 = vmatpush2.msra.mxu0 0.0
        %1961 = vmatprep.subr.mxu0 0.0
        %1962 = vmatpush2.msra.mxu0 0.0
        %1963 = vmatprep.subr.mxu0 0.0
        %1964 = vmatpush2.msra.mxu0 0.0
        %1965 = vmatprep.subr.mxu0 0.0
        %1966 = vmatpush2.msra.mxu0 0.0
        %1967 = vmatprep.mubr.f32.mxu0 0.0
        %1968 = vmatmul.mubr.f32.gmra.mxu0 %v1892
        %v1969 = vpop.f32.mrf.mxu0
        %v1970 = vadd.f32 0.0, %v1969
        %v1971 = vpop.f32.mrf.mxu0
        %1972 = vmatprep.mubr.f32.mxu0 0.0
        %1973 = vmatmul.mubr.f32.gmra.mxu0 %v1895
        %v1974 = vpop.f32.mrf.mxu0
        %v1975 = vadd.f32 0.0, %v1974
        %v1976 = vpop.f32.mrf.mxu0
        %1977 = vmatprep.mubr.f32.mxu0 0.0
        %1978 = vmatmul.mubr.f32.gmra.mxu0 %v1898
        %v1979 = vpop.f32.mrf.mxu0
        %v1980 = vadd.f32 0.0, %v1979
        %v1981 = vpop.f32.mrf.mxu0
        %1982 = vmatprep.mubr.f32.mxu0 0.0
        %1983 = vmatmul.mubr.f32.gmra.mxu0 %v1901
        %v1984 = vpop.f32.mrf.mxu0
        %v1985 = vadd.f32 0.0, %v1984
        %v1986 = vpop.f32.mrf.mxu0
        %1987 = vdwg.mxu0
        %v1988 = vadd.f32 %v1788, %v1970
        %v1989 = vadd.f32 %v1793, %v1975
        %v1990 = vadd.f32 %v1798, %v1980
        %v1991 = vadd.f32 %v1803, %v1985
        %1992 = vmatprep.subr.mxu0 0.0
        %1993 = vmatpush1.msra.mxu0 0.0
        %1994 = vmatprep.subr.mxu0 0.0
        %1995 = vmatpush1.msra.mxu0 0.0
        %1996 = vmatprep.subr.mxu0 0.0
        %1997 = vmatpush1.msra.mxu0 0.0
        %1998 = vmatprep.subr.mxu0 0.0
        %1999 = vmatpush1.msra.mxu0 0.0
        %2000 = vmatprep.subr.mxu0 0.0
        %2001 = vmatpush1.msra.mxu0 0.0
        %2002 = vmatprep.subr.mxu0 0.0
        %2003 = vmatpush1.msra.mxu0 0.0
        %2004 = vmatprep.subr.mxu0 0.0
        %2005 = vmatpush1.msra.mxu0 0.0
        %2006 = vmatprep.subr.mxu0 0.0
        %2007 = vmatpush1.msra.mxu0 0.0
        %2008 = vmatprep.subr.mxu0 0.0
        %2009 = vmatpush1.msra.mxu0 0.0
        %2010 = vmatprep.subr.mxu0 0.0
        %2011 = vmatpush1.msra.mxu0 0.0
        %2012 = vmatprep.subr.mxu0 0.0
        %2013 = vmatpush1.msra.mxu0 0.0
        %2014 = vmatprep.subr.mxu0 0.0
        %2015 = vmatpush1.msra.mxu0 0.0
        %2016 = vmatprep.subr.mxu0 0.0
        %2017 = vmatpush1.msra.mxu0 %v1526
        %2018 = vmatprep.subr.mxu0 0.0
        %2019 = vmatpush1.msra.mxu0 %v1525
        %2020 = vmatprep.subr.mxu0 0.0
        %2021 = vmatpush1.msra.mxu0 %v1524
        %2022 = vmatprep.subr.mxu0 0.0
        %2023 = vmatpush1.msra.mxu0 %v1523
        %2024 = vmatprep.subr.mxu0 0.0
        %2025 = vmatpush2.msra.mxu0 0.0
        %2026 = vmatprep.subr.mxu0 0.0
        %2027 = vmatpush2.msra.mxu0 0.0
        %2028 = vmatprep.subr.mxu0 0.0
        %2029 = vmatpush2.msra.mxu0 0.0
        %2030 = vmatprep.subr.mxu0 0.0
        %2031 = vmatpush2.msra.mxu0 0.0
        %2032 = vmatprep.subr.mxu0 0.0
        %2033 = vmatpush2.msra.mxu0 0.0
        %2034 = vmatprep.subr.mxu0 0.0
        %2035 = vmatpush2.msra.mxu0 0.0
        %2036 = vmatprep.subr.mxu0 0.0
        %2037 = vmatpush2.msra.mxu0 0.0
        %2038 = vmatprep.subr.mxu0 0.0
        %2039 = vmatpush2.msra.mxu0 0.0
        %2040 = vmatprep.subr.mxu0 0.0
        %2041 = vmatpush2.msra.mxu0 0.0
        %2042 = vmatprep.subr.mxu0 0.0
        %2043 = vmatpush2.msra.mxu0 0.0
        %2044 = vmatprep.subr.mxu0 0.0
        %2045 = vmatpush2.msra.mxu0 0.0
        %2046 = vmatprep.subr.mxu0 0.0
        %2047 = vmatpush2.msra.mxu0 0.0
        %2048 = vmatprep.subr.mxu0 0.0
        %2049 = vmatpush2.msra.mxu0 0.0
        %2050 = vmatprep.subr.mxu0 0.0
        %2051 = vmatpush2.msra.mxu0 0.0
        %2052 = vmatprep.subr.mxu0 0.0
        %2053 = vmatpush2.msra.mxu0 0.0
        %2054 = vmatprep.subr.mxu0 0.0
        %2055 = vmatpush2.msra.mxu0 0.0
        %2056 = vmatprep.mubr.f32.mxu0 0.0
        %2057 = vmatmul.mubr.f32.gmra.mxu0 %v1122
        %v2058 = vpop.f32.mrf.mxu0
        %v2059 = vadd.f32 0.0, %v2058
        %v2060 = vpop.f32.mrf.mxu0
        %2061 = vmatprep.mubr.f32.mxu0 0.0
        %2062 = vmatmul.mubr.f32.gmra.mxu0 %v1125
        %v2063 = vpop.f32.mrf.mxu0
        %v2064 = vadd.f32 0.0, %v2063
        %v2065 = vpop.f32.mrf.mxu0
        %2066 = vmatprep.mubr.f32.mxu0 0.0
        %2067 = vmatmul.mubr.f32.gmra.mxu0 %v1128
        %v2068 = vpop.f32.mrf.mxu0
        %v2069 = vadd.f32 0.0, %v2068
        %v2070 = vpop.f32.mrf.mxu0
        %2071 = vmatprep.mubr.f32.mxu0 0.0
        %2072 = vmatmul.mubr.f32.gmra.mxu0 %v1131
        %v2073 = vpop.f32.mrf.mxu0
        %v2074 = vadd.f32 0.0, %v2073
        %v2075 = vpop.f32.mrf.mxu0
        %2076 = vdwg.mxu0
        %v2078 = vsel %vm441, %v2059, 0
        %v2081 = vsel %vm441, %v2064, 0
        %v2084 = vsel %vm441, %v2069, 0
        %v2087 = vsel %vm441, %v2074, 0
        %2089 = vmatprep.subr.mxu0 0.0
        %2090 = vmatpush1.msra.mxu0 0.0
        %2091 = vmatprep.subr.mxu0 0.0
        %2092 = vmatpush1.msra.mxu0 0.0
        %2093 = vmatprep.subr.mxu0 0.0
        %2094 = vmatpush1.msra.mxu0 0.0
        %2095 = vmatprep.subr.mxu0 0.0
        %2096 = vmatpush1.msra.mxu0 0.0
        %2097 = vmatprep.subr.mxu0 0.0
        %2098 = vmatpush1.msra.mxu0 0.0
        %2099 = vmatprep.subr.mxu0 0.0
        %2100 = vmatpush1.msra.mxu0 0.0
        %2101 = vmatprep.subr.mxu0 0.0
        %2102 = vmatpush1.msra.mxu0 0.0
        %2103 = vmatprep.subr.mxu0 0.0
        %2104 = vmatpush1.msra.mxu0 0.0
        %2105 = vmatprep.subr.mxu0 0.0
        %2106 = vmatpush1.msra.mxu0 0.0
        %2107 = vmatprep.subr.mxu0 0.0
        %2108 = vmatpush1.msra.mxu0 0.0
        %2109 = vmatprep.subr.mxu0 0.0
        %2110 = vmatpush1.msra.mxu0 0.0
        %2111 = vmatprep.subr.mxu0 0.0
        %2112 = vmatpush1.msra.mxu0 0.0
        %2113 = vmatprep.subr.mxu0 0.0
        %2114 = vmatpush1.msra.mxu0 %v1349
        %2115 = vmatprep.subr.mxu0 0.0
        %2116 = vmatpush1.msra.mxu0 %v1348
        %2117 = vmatprep.subr.mxu0 0.0
        %2118 = vmatpush1.msra.mxu0 %v1347
        %2119 = vmatprep.subr.mxu0 0.0
        %2120 = vmatpush1.msra.mxu0 %v1346
        %2121 = vmatprep.subr.mxu0 0.0
        %2122 = vmatpush2.msra.mxu0 0.0
        %2123 = vmatprep.subr.mxu0 0.0
        %2124 = vmatpush2.msra.mxu0 0.0
        %2125 = vmatprep.subr.mxu0 0.0
        %2126 = vmatpush2.msra.mxu0 0.0
        %2127 = vmatprep.subr.mxu0 0.0
        %2128 = vmatpush2.msra.mxu0 0.0
        %2129 = vmatprep.subr.mxu0 0.0
        %2130 = vmatpush2.msra.mxu0 0.0
        %2131 = vmatprep.subr.mxu0 0.0
        %2132 = vmatpush2.msra.mxu0 0.0
        %2133 = vmatprep.subr.mxu0 0.0
        %2134 = vmatpush2.msra.mxu0 0.0
        %2135 = vmatprep.subr.mxu0 0.0
        %2136 = vmatpush2.msra.mxu0 0.0
        %2137 = vmatprep.subr.mxu0 0.0
        %2138 = vmatpush2.msra.mxu0 0.0
        %2139 = vmatprep.subr.mxu0 0.0
        %2140 = vmatpush2.msra.mxu0 0.0
        %2141 = vmatprep.subr.mxu0 0.0
        %2142 = vmatpush2.msra.mxu0 0.0
        %2143 = vmatprep.subr.mxu0 0.0
        %2144 = vmatpush2.msra.mxu0 0.0
        %2145 = vmatprep.subr.mxu0 0.0
        %2146 = vmatpush2.msra.mxu0 0.0
        %2147 = vmatprep.subr.mxu0 0.0
        %2148 = vmatpush2.msra.mxu0 0.0
        %2149 = vmatprep.subr.mxu0 0.0
        %2150 = vmatpush2.msra.mxu0 0.0
        %2151 = vmatprep.subr.mxu0 0.0
        %2152 = vmatpush2.msra.mxu0 0.0
        %2153 = vmatprep.mubr.f32.mxu0 0.0
        %2154 = vmatmul.mubr.f32.gmra.mxu0 %v2078
        %v2155 = vpop.f32.mrf.mxu0
        %v2156 = vadd.f32 0.0, %v2155
        %v2157 = vpop.f32.mrf.mxu0
        %2158 = vmatprep.mubr.f32.mxu0 0.0
        %2159 = vmatmul.mubr.f32.gmra.mxu0 %v2081
        %v2160 = vpop.f32.mrf.mxu0
        %v2161 = vadd.f32 0.0, %v2160
        %v2162 = vpop.f32.mrf.mxu0
        %2163 = vmatprep.mubr.f32.mxu0 0.0
        %2164 = vmatmul.mubr.f32.gmra.mxu0 %v2084
        %v2165 = vpop.f32.mrf.mxu0
        %v2166 = vadd.f32 0.0, %v2165
        %v2167 = vpop.f32.mrf.mxu0
        %2168 = vmatprep.mubr.f32.mxu0 0.0
        %2169 = vmatmul.mubr.f32.gmra.mxu0 %v2087
        %v2170 = vpop.f32.mrf.mxu0
        %v2171 = vadd.f32 0.0, %v2170
        %v2172 = vpop.f32.mrf.mxu0
        %2173 = vdwg.mxu0
        %v2174 = vadd.f32 %v1988, %v2156
        %v2175 = vadd.f32 %v1989, %v2161
        %v2176 = vadd.f32 %v1990, %v2166
        %v2177 = vadd.f32 %v1991, %v2171
        %v2178 = vadd.f32 %v2174, %v1523
        %v2179 = vadd.f32 %v2175, %v1524
        %v2180 = vadd.f32 %v2176, %v1525
        %v2181 = vadd.f32 %v2177, %v1526
        %v2182 = vld [vmem:[%s7] sm:$0x1]
        %v2184 = vlaneseq
        %v2185 = vshrl.u32 %v2184, 7
        %v2186 = vsub.s32 0, %v2185
        %v2187 = vrot.slane %v2182, %v2186
        %v2189 = vmul.f32 %v2178, %v2187
        %v2190 = vmul.f32 %v2179, %v2187
        %v2191 = vmul.f32 %v2180, %v2187
        %v2192 = vmul.f32 %v2181, %v2187
        %v2194 = vsel %vm441, %v2189, 0
        %v2197 = vsel %vm441, %v2190, 0
        %v2200 = vsel %vm441, %v2178, 0
        %v2203 = vsel %vm441, %v2179, 0
        %2205 = vmatprep.subr.mxu0 0.0
        %2206 = vmatpush1.xpose.msra.mxu0 0.0
        %2207 = vmatprep.subr.mxu0 0.0
        %2208 = vmatpush1.xpose.msra.mxu0 0.0
        %2209 = vmatprep.subr.mxu0 0.0
        %2210 = vmatpush1.xpose.msra.mxu0 0.0
        %2211 = vmatprep.subr.mxu0 0.0
        %2212 = vmatpush1.xpose.msra.mxu0 0.0
        %2213 = vmatprep.subr.mxu0 0.0
        %2214 = vmatpush1.xpose.msra.mxu0 0.0
        %2215 = vmatprep.subr.mxu0 0.0
        %2216 = vmatpush1.xpose.msra.mxu0 0.0
        %2217 = vmatprep.subr.mxu0 0.0
        %2218 = vmatpush1.xpose.msra.mxu0 0.0
        %2219 = vmatprep.subr.mxu0 0.0
        %2220 = vmatpush1.xpose.msra.mxu0 0.0
        %2221 = vmatprep.subr.mxu0 0.0
        %2222 = vmatpush1.xpose.msra.mxu0 0.0
        %2223 = vmatprep.subr.mxu0 0.0
        %2224 = vmatpush1.xpose.msra.mxu0 0.0
        %2225 = vmatprep.subr.mxu0 0.0
        %2226 = vmatpush1.xpose.msra.mxu0 0.0
        %2227 = vmatprep.subr.mxu0 0.0
        %2228 = vmatpush1.xpose.msra.mxu0 0.0
        %2229 = vmatprep.subr.mxu0 0.0
        %2230 = vmatpush1.xpose.msra.mxu0 0.0
        %2231 = vmatprep.subr.mxu0 0.0
        %2232 = vmatpush1.xpose.msra.mxu0 0.0
        %2233 = vmatprep.subr.mxu0 0.0
        %2234 = vmatpush1.xpose.msra.mxu0 %v2203
        %2235 = vmatprep.subr.mxu0 0.0
        %2236 = vmatpush1.xpose.msra.mxu0 %v2200
        %2237 = vmatprep.subr.mxu0 0.0
        %2238 = vmatpush2.xpose.msra.mxu0 0.0
        %2239 = vmatprep.subr.mxu0 0.0
        %2240 = vmatpush2.xpose.msra.mxu0 0.0
        %2241 = vmatprep.subr.mxu0 0.0
        %2242 = vmatpush2.xpose.msra.mxu0 0.0
        %2243 = vmatprep.subr.mxu0 0.0
        %2244 = vmatpush2.xpose.msra.mxu0 0.0
        %2245 = vmatprep.subr.mxu0 0.0
        %2246 = vmatpush2.xpose.msra.mxu0 0.0
        %2247 = vmatprep.subr.mxu0 0.0
        %2248 = vmatpush2.xpose.msra.mxu0 0.0
        %2249 = vmatprep.subr.mxu0 0.0
        %2250 = vmatpush2.xpose.msra.mxu0 0.0
        %2251 = vmatprep.subr.mxu0 0.0
        %2252 = vmatpush2.xpose.msra.mxu0 0.0
        %2253 = vmatprep.subr.mxu0 0.0
        %2254 = vmatpush2.xpose.msra.mxu0 0.0
        %2255 = vmatprep.subr.mxu0 0.0
        %2256 = vmatpush2.xpose.msra.mxu0 0.0
        %2257 = vmatprep.subr.mxu0 0.0
        %2258 = vmatpush2.xpose.msra.mxu0 0.0
        %2259 = vmatprep.subr.mxu0 0.0
        %2260 = vmatpush2.xpose.msra.mxu0 0.0
        %2261 = vmatprep.subr.mxu0 0.0
        %2262 = vmatpush2.xpose.msra.mxu0 0.0
        %2263 = vmatprep.subr.mxu0 0.0
        %2264 = vmatpush2.xpose.msra.mxu0 0.0
        %2265 = vmatprep.subr.mxu0 0.0
        %2266 = vmatpush2.xpose.msra.mxu0 0.0
        %2267 = vmatprep.subr.mxu0 0.0
        %2268 = vmatpush2.xpose.msra.mxu0 0.0
        %2269 = vmatprep.mubr.f32.mxu0 0.0
        %2270 = vmatmul.mubr.f32.gmra.mxu0 %v2194
        %v2271 = vpop.f32.mrf.mxu0
        %v2272 = vadd.f32 0.0, %v2271
        %v2273 = vpop.f32.mrf.mxu0
        %2274 = vmatprep.mubr.f32.mxu0 0.0
        %2275 = vmatmul.mubr.f32.gmra.mxu0 %v2197
        %v2276 = vpop.f32.mrf.mxu0
        %v2277 = vadd.f32 0.0, %v2276
        %v2278 = vpop.f32.mrf.mxu0
        %2279 = vdwg.mxu0
        %v2281 = vsel %vm441, %v2191, 0
        %v2284 = vsel %vm441, %v2192, 0
        %v2287 = vsel %vm441, %v2180, 0
        %v2290 = vsel %vm441, %v2181, 0
        %2292 = vmatprep.subr.mxu0 0.0
        %2293 = vmatpush1.xpose.msra.mxu0 0.0
        %2294 = vmatprep.subr.mxu0 0.0
        %2295 = vmatpush1.xpose.msra.mxu0 0.0
        %2296 = vmatprep.subr.mxu0 0.0
        %2297 = vmatpush1.xpose.msra.mxu0 0.0
        %2298 = vmatprep.subr.mxu0 0.0
        %2299 = vmatpush1.xpose.msra.mxu0 0.0
        %2300 = vmatprep.subr.mxu0 0.0
        %2301 = vmatpush1.xpose.msra.mxu0 0.0
        %2302 = vmatprep.subr.mxu0 0.0
        %2303 = vmatpush1.xpose.msra.mxu0 0.0
        %2304 = vmatprep.subr.mxu0 0.0
        %2305 = vmatpush1.xpose.msra.mxu0 0.0
        %2306 = vmatprep.subr.mxu0 0.0
        %2307 = vmatpush1.xpose.msra.mxu0 0.0
        %2308 = vmatprep.subr.mxu0 0.0
        %2309 = vmatpush1.xpose.msra.mxu0 0.0
        %2310 = vmatprep.subr.mxu0 0.0
        %2311 = vmatpush1.xpose.msra.mxu0 0.0
        %2312 = vmatprep.subr.mxu0 0.0
        %2313 = vmatpush1.xpose.msra.mxu0 0.0
        %2314 = vmatprep.subr.mxu0 0.0
        %2315 = vmatpush1.xpose.msra.mxu0 0.0
        %2316 = vmatprep.subr.mxu0 0.0
        %2317 = vmatpush1.xpose.msra.mxu0 0.0
        %2318 = vmatprep.subr.mxu0 0.0
        %2319 = vmatpush1.xpose.msra.mxu0 0.0
        %2320 = vmatprep.subr.mxu0 0.0
        %2321 = vmatpush1.xpose.msra.mxu0 %v2290
        %2322 = vmatprep.subr.mxu0 0.0
        %2323 = vmatpush1.xpose.msra.mxu0 %v2287
        %2324 = vmatprep.subr.mxu0 0.0
        %2325 = vmatpush2.xpose.msra.mxu0 0.0
        %2326 = vmatprep.subr.mxu0 0.0
        %2327 = vmatpush2.xpose.msra.mxu0 0.0
        %2328 = vmatprep.subr.mxu0 0.0
        %2329 = vmatpush2.xpose.msra.mxu0 0.0
        %2330 = vmatprep.subr.mxu0 0.0
        %2331 = vmatpush2.xpose.msra.mxu0 0.0
        %2332 = vmatprep.subr.mxu0 0.0
        %2333 = vmatpush2.xpose.msra.mxu0 0.0
        %2334 = vmatprep.subr.mxu0 0.0
        %2335 = vmatpush2.xpose.msra.mxu0 0.0
        %2336 = vmatprep.subr.mxu0 0.0
        %2337 = vmatpush2.xpose.msra.mxu0 0.0
        %2338 = vmatprep.subr.mxu0 0.0
        %2339 = vmatpush2.xpose.msra.mxu0 0.0
        %2340 = vmatprep.subr.mxu0 0.0
        %2341 = vmatpush2.xpose.msra.mxu0 0.0
        %2342 = vmatprep.subr.mxu0 0.0
        %2343 = vmatpush2.xpose.msra.mxu0 0.0
        %2344 = vmatprep.subr.mxu0 0.0
        %2345 = vmatpush2.xpose.msra.mxu0 0.0
        %2346 = vmatprep.subr.mxu0 0.0
        %2347 = vmatpush2.xpose.msra.mxu0 0.0
        %2348 = vmatprep.subr.mxu0 0.0
        %2349 = vmatpush2.xpose.msra.mxu0 0.0
        %2350 = vmatprep.subr.mxu0 0.0
        %2351 = vmatpush2.xpose.msra.mxu0 0.0
        %2352 = vmatprep.subr.mxu0 0.0
        %2353 = vmatpush2.xpose.msra.mxu0 0.0
        %2354 = vmatprep.subr.mxu0 0.0
        %2355 = vmatpush2.xpose.msra.mxu0 0.0
        %2356 = vmatprep.mubr.f32.mxu0 0.0
        %2357 = vmatmul.mubr.f32.gmra.mxu0 %v2281
        %v2358 = vpop.f32.mrf.mxu0
        %v2359 = vadd.f32 0.0, %v2358
        %v2360 = vpop.f32.mrf.mxu0
        %2361 = vmatprep.mubr.f32.mxu0 0.0
        %2362 = vmatmul.mubr.f32.gmra.mxu0 %v2284
        %v2363 = vpop.f32.mrf.mxu0
        %v2364 = vadd.f32 0.0, %v2363
        %v2365 = vpop.f32.mrf.mxu0
        %2366 = vdwg.mxu0
        %v2367 = vcombine.high %v2272, 0.0
        %v2369 = vunpack.c.l.s4 1983009808
        %v2370 = vunpack.c.0.s8 %v2369
        %v2371 = vlaneseq
        %v2372 = vshrl.u32 %v2371, 7
        %v2373 = vsub.s32 %v2370, %v2372
        %v2374 = vrot.slane %v2272, %v2373
        %v2376 = vunpack.c.l.s4 1983009808
        %v2377 = vunpack.c.0.s8 %v2376
        %v2378 = vlaneseq
        %v2379 = vshrl.u32 %v2378, 7
        %v2380 = vsub.s32 %v2377, %v2379
        %v2381 = vrot.slane %v2367, %v2380
        %v2382 = vcombine.high %v2359, 0.0
        %v2384 = vunpack.c.l.s4 1983009808
        %v2385 = vunpack.c.0.s8 %v2384
        %v2386 = vlaneseq
        %v2387 = vshrl.u32 %v2386, 7
        %v2388 = vsub.s32 %v2385, %v2387
        %v2389 = vrot.slane %v2359, %v2388
        %v2391 = vunpack.c.l.s4 1983009808
        %v2392 = vunpack.c.0.s8 %v2391
        %v2393 = vlaneseq
        %v2394 = vshrl.u32 %v2393, 7
        %v2395 = vsub.s32 %v2392, %v2394
        %v2396 = vrot.slane %v2382, %v2395
        %v2397 = vcombine.low %v2374, %v2389
        %v2398 = vcombine.high %v2374, %v2389
        %v2400 = vunpack.c.l.s4 1934713408
        %v2401 = vunpack.c.0.s8 %v2400
        %v2402 = vlaneseq
        %v2403 = vshrl.u32 %v2402, 7
        %v2404 = vsub.s32 %v2401, %v2403
        %v2405 = vrot.slane %v2397, %v2404
        %v2407 = vunpack.c.l.s4 1934713408
        %v2408 = vunpack.c.0.s8 %v2407
        %v2409 = vlaneseq
        %v2410 = vshrl.u32 %v2409, 7
        %v2411 = vsub.s32 %v2408, %v2410
        %v2412 = vrot.slane %v2398, %v2411
        %v2413 = vcombine.low %v2381, %v2396
        %v2414 = vcombine.high %v2381, %v2396
        %v2416 = vunpack.c.l.s4 1934713408
        %v2417 = vunpack.c.0.s8 %v2416
        %v2418 = vlaneseq
        %v2419 = vshrl.u32 %v2418, 7
        %v2420 = vsub.s32 %v2417, %v2419
        %v2421 = vrot.slane %v2413, %v2420
        %v2423 = vunpack.c.l.s4 1934713408
        %v2424 = vunpack.c.0.s8 %v2423
        %v2425 = vlaneseq
        %v2426 = vshrl.u32 %v2425, 7
        %v2427 = vsub.s32 %v2424, %v2426
        %v2428 = vrot.slane %v2414, %v2427
        %v2429 = vcombine.high %v2405, 0.0
        %v2430 = vcombine.high %v2412, 0.0
        %v2431 = vcombine.high %v2421, 0.0
        %v2432 = vcombine.high %v2428, 0.0
        %v2433 = vcombine.high %v2277, 0.0
        %v2435 = vunpack.c.l.s4 1983009808
        %v2436 = vunpack.c.0.s8 %v2435
        %v2437 = vlaneseq
        %v2438 = vshrl.u32 %v2437, 7
        %v2439 = vsub.s32 %v2436, %v2438
        %v2440 = vrot.slane %v2277, %v2439
        %v2442 = vunpack.c.l.s4 1983009808
        %v2443 = vunpack.c.0.s8 %v2442
        %v2444 = vlaneseq
        %v2445 = vshrl.u32 %v2444, 7
        %v2446 = vsub.s32 %v2443, %v2445
        %v2447 = vrot.slane %v2433, %v2446
        %v2448 = vcombine.high %v2364, 0.0
        %v2450 = vunpack.c.l.s4 1983009808
        %v2451 = vunpack.c.0.s8 %v2450
        %v2452 = vlaneseq
        %v2453 = vshrl.u32 %v2452, 7
        %v2454 = vsub.s32 %v2451, %v2453
        %v2455 = vrot.slane %v2364, %v2454
        %v2457 = vunpack.c.l.s4 1983009808
        %v2458 = vunpack.c.0.s8 %v2457
        %v2459 = vlaneseq
        %v2460 = vshrl.u32 %v2459, 7
        %v2461 = vsub.s32 %v2458, %v2460
        %v2462 = vrot.slane %v2448, %v2461
        %v2463 = vcombine.low %v2440, %v2455
        %v2464 = vcombine.high %v2440, %v2455
        %v2466 = vunpack.c.l.s4 1934713408
        %v2467 = vunpack.c.0.s8 %v2466
        %v2468 = vlaneseq
        %v2469 = vshrl.u32 %v2468, 7
        %v2470 = vsub.s32 %v2467, %v2469
        %v2471 = vrot.slane %v2463, %v2470
        %v2473 = vunpack.c.l.s4 1934713408
        %v2474 = vunpack.c.0.s8 %v2473
        %v2475 = vlaneseq
        %v2476 = vshrl.u32 %v2475, 7
        %v2477 = vsub.s32 %v2474, %v2476
        %v2478 = vrot.slane %v2464, %v2477
        %v2479 = vcombine.low %v2447, %v2462
        %v2480 = vcombine.high %v2447, %v2462
        %v2482 = vunpack.c.l.s4 1934713408
        %v2483 = vunpack.c.0.s8 %v2482
        %v2484 = vlaneseq
        %v2485 = vshrl.u32 %v2484, 7
        %v2486 = vsub.s32 %v2483, %v2485
        %v2487 = vrot.slane %v2479, %v2486
        %v2489 = vunpack.c.l.s4 1934713408
        %v2490 = vunpack.c.0.s8 %v2489
        %v2491 = vlaneseq
        %v2492 = vshrl.u32 %v2491, 7
        %v2493 = vsub.s32 %v2490, %v2492
        %v2494 = vrot.slane %v2480, %v2493
        %v2495 = vcombine.high %v2471, 0.0
        %v2496 = vcombine.high %v2478, 0.0
        %v2497 = vcombine.high %v2487, 0.0
        %v2498 = vcombine.high %v2494, 0.0
        %2500 = vrot.lane.b32.xlu0 %v2429, 16
        %v2501 = vpop.permute.xlu0 %2500
        %2504 = vrot.lane.b32.xlu0 %v2412, 32
        %v2505 = vpop.permute.xlu0 %2504
        %2508 = vrot.lane.b32.xlu0 %v2430, 48
        %v2509 = vpop.permute.xlu0 %2508
        %2512 = vrot.lane.b32.xlu0 %v2421, 64
        %v2513 = vpop.permute.xlu0 %2512
        %2516 = vrot.lane.b32.xlu0 %v2431, 80
        %v2517 = vpop.permute.xlu0 %2516
        %2520 = vrot.lane.b32.xlu0 %v2428, 96
        %v2521 = vpop.permute.xlu0 %2520
        %2524 = vrot.lane.b32.xlu0 %v2432, 112
        %v2525 = vpop.permute.xlu0 %2524
        %2528 = vrot.lane.b32.xlu0 %v2495, 16
        %v2529 = vpop.permute.xlu0 %2528
        %2532 = vrot.lane.b32.xlu0 %v2478, 32
        %v2533 = vpop.permute.xlu0 %2532
        %2536 = vrot.lane.b32.xlu0 %v2496, 48
        %v2537 = vpop.permute.xlu0 %2536
        %2540 = vrot.lane.b32.xlu0 %v2487, 64
        %v2541 = vpop.permute.xlu0 %2540
        %2544 = vrot.lane.b32.xlu0 %v2497, 80
        %v2545 = vpop.permute.xlu0 %2544
        %2548 = vrot.lane.b32.xlu0 %v2494, 96
        %v2549 = vpop.permute.xlu0 %2548
        %2552 = vrot.lane.b32.xlu0 %v2498, 112
        %v2553 = vpop.permute.xlu0 %2552
        %vm2555 = vcmask 130048
        %v2556 = vsel %vm2555, %v2405, %v2501
        %v2557 = vsel %vm441, %v2556, %v2505
        %vm2558 = vcmask 392192
        %v2559 = vsel %vm2558, %v2557, %v2509
        %vm2560 = vcmask 523264
        %v2561 = vsel %vm2560, %v2559, %v2513
        %vm2562 = vcmask 654336
        %v2563 = vsel %vm2562, %v2561, %v2517
        %vm2564 = vcmask 785408
        %v2565 = vsel %vm2564, %v2563, %v2521
        %vm2566 = vcmask 916480
        %v2567 = vsel %vm2566, %v2565, %v2525
        %v2568 = vsel %vm2555, %v2471, %v2529
        %v2569 = vsel %vm441, %v2568, %v2533
        %v2570 = vsel %vm2558, %v2569, %v2537
        %v2571 = vsel %vm2560, %v2570, %v2541
        %v2572 = vsel %vm2562, %v2571, %v2545
        %v2573 = vsel %vm2564, %v2572, %v2549
        %v2574 = vsel %vm2566, %v2573, %v2553
        %v2577 = vcombine.low %v2567, %v2574
        %v2579 = vunpack.c.l.s4 1983009808
        %v2580 = vunpack.c.0.s8 %v2579
        %v2581 = vlaneseq
        %v2582 = vshrl.u32 %v2581, 7
        %v2583 = vsub.s32 %v2580, %v2582
        %v2584 = vrot.slane %v2577, %v2583
        %2586 = vst [vmem:[%s412] sm:$0xf] %v2584
        %p2587 = scmp.lt.s32.totalorder %s19, 1
        %s2588 = scalar_select %p2587, %s19, 1
        %s2589 = smul.addr %s2588, 2
        %s2590 = smul.addr %s2589, 2
        %s2591 = scalar_lea.vmem %s8, %s2590
        // Predicated region
        $region91: #{rgcn_forward.1} parent=85 // pred_check
          %p2592 = pneg %p220
        $region92: #{rgcn_forward.1} parent=85 // pred_check_branch
          %2594 = sbr.rel (%p2592) target = $region94
        $region93: #{rgcn_forward.1} parent=85 // pred_region
          _
        $region94: #{rgcn_forward.1} parent=85 // pred_fallthru
          _
      $region86: #{rgcn_forward.1} parent=5 // pred_fallthru
        _
      %p2595 = scmp.le.s32.totalorder 2, %s14
      // Predicated region
      $region95: #{rgcn_forward.1} parent=5 // pred_check
        %p2596 = pneg %p2595
      $region96: #{rgcn_forward.1} parent=5 // pred_check_branch
        %2598 = sbr.rel (%p2596) target = $region98
      $region97: #{rgcn_forward.1} parent=5 // pred_region
        %s2599 = ssub.s32 %s14, 2
        // Predicated region
        $region99: #{rgcn_forward.1} parent=97 // pred_check
          %p2600 = pneg %p226
        $region100: #{rgcn_forward.1} parent=97 // pred_check_branch
          %2602 = sbr.rel (%p2600) target = $region102
        $region101: #{rgcn_forward.1} parent=97 // pred_region
          %p2603 = scmp.lt.s32.totalorder %s20, 1
          %s2604 = scalar_select %p2603, %s20, 1
          %s2605 = smul.addr %s2604, 2
          %s2606 = smul.addr %s2605, 2
          %s2607 = scalar_lea.vmem %s8, %s2606
        $region102: #{rgcn_forward.1} parent=97 // pred_fallthru
          _
      $region98: #{rgcn_forward.1} parent=5 // pred_fallthru
        _
    $region6: #{rgcn_forward.1} parent=1 // loop_footer
      %s18 = sadd.s32 1, %s14
    $region7: #{rgcn_forward.1} parent=1 // loop_footer_branch
      %13 = sbr.rel target = $region3
    $region8: #{rgcn_forward.1} parent=1 // loop_exit
      _

</llo_original>
